<compile_context>
chip_gen: v7x
topology: tpu7x:2x2x1
jax: 0.10.0
libtpu: 0.0.40
codegen_flags: <defaults>
</compile_context>

<pallas_src>
import functools
import math

import jax
import jax.numpy as jnp
from jax import lax
from jax.experimental import pallas as pl
from jax.experimental.pallas import tpu as pltpu

D_MODEL = 16
N_HEADS = 4
HEAD_DIM = D_MODEL // N_HEADS
PFF_DIM = 32
SCALE = math.sqrt(float(D_MODEL // N_HEADS))  # torch.sqrt(FloatTensor([d_model // n_heads]))
LN_EPS = 1e-5


def _encoder_layer_kernel(
    x_ref,                  # (S, D)       one batch element
    wqkv_ref,               # (H, D, 3Dh)  per-head [Wq^T/scale | Wk^T | Wv^T]
    bqkv_ref,               # (H, 1, 3Dh)  per-head [bq/scale | bk | bv]
    wo_ref,                 # (H, Dh, D)   per-head slabs of Wo^T
    bo_ref,                 # (1, D)
    ln1_g_ref, ln1_b_ref,   # (1, D), (1, D)
    w1_ref, b1_ref,         # (D, P) pre-transposed, (1, P)
    w2_ref, b2_ref,         # (P, D) pre-transposed, (1, D)
    ln2_g_ref, ln2_b_ref,   # (1, D), (1, D)
    out_ref,                # (S, D)
):
    x = x_ref[...]                                   # (S, D) f32
    seq = x.shape[0]

    # ---- fused per-head QKV projection: one batched matmul over heads ----
    xb = jnp.broadcast_to(x, (N_HEADS, seq, D_MODEL))              # (H, S, D)
    qkv = jnp.einsum("hsd,hde->hse", xb, wqkv_ref[...],
                     preferred_element_type=jnp.float32) + bqkv_ref[...]  # (H, S, 3Dh)
    q = qkv[:, :, :HEAD_DIM]                                       # (H, S, Dh), pre-scaled
    k = qkv[:, :, HEAD_DIM:2 * HEAD_DIM]                           # (H, S, Dh)
    v = qkv[:, :, 2 * HEAD_DIM:]                                   # (H, S, Dh)

    # ---- attention, all heads batched ----
    s = jnp.einsum("hqd,hkd->hqk", q, k,
                   preferred_element_type=jnp.float32)             # (H, S, S) = energy
    m = jnp.max(s, axis=-1, keepdims=True)
    e = jnp.exp(s - m)
    p = e * pl.reciprocal(jnp.sum(e, axis=-1, keepdims=True), approx=True)
    # (dropout on attention skipped: inference-mode identity)
    w = jnp.einsum("hqk,hkd->hqd", p, v,
                   preferred_element_type=jnp.float32)             # (H, S, Dh)

    # ---- head-merge folded into the output projection ----
    contrib = jnp.einsum("hsd,hdm->hsm", w, wo_ref[...],
                         preferred_element_type=jnp.float32)       # (H, S, D)
    attn_out = jnp.sum(contrib, axis=0) + bo_ref[...]              # (S, D)

    # ---- residual + LayerNorm 1 (dropout skipped) ----
    h1 = x + attn_out
    mu1 = jnp.mean(h1, axis=-1, keepdims=True)
    var1 = jnp.mean((h1 - mu1) ** 2, axis=-1, keepdims=True)
    h1 = (h1 - mu1) * lax.rsqrt(var1 + LN_EPS)
    h1 = h1 * ln1_g_ref[...] + ln1_b_ref[...]

    # ---- position-wise feed-forward (relu, dropout skipped) ----
    f = jnp.dot(h1, w1_ref[...], preferred_element_type=jnp.float32) + b1_ref[...]
    f = jnp.maximum(f, 0.0)
    f = jnp.dot(f, w2_ref[...], preferred_element_type=jnp.float32) + b2_ref[...]

    # ---- residual + LayerNorm 2 (dropout skipped) ----
    h2 = h1 + f
    mu2 = jnp.mean(h2, axis=-1, keepdims=True)
    var2 = jnp.mean((h2 - mu2) ** 2, axis=-1, keepdims=True)
    h2 = (h2 - mu2) * lax.rsqrt(var2 + LN_EPS)
    out_ref[...] = (h2 * ln2_g_ref[...] + ln2_b_ref[...]).astype(out_ref.dtype)


def fuse_params(params):
    """One-time (hoisted) weight fusion: per-head QKV, scale fold, transposes."""
    def per_head_w(w_t):   # (D_in, D_out) -> (H, D_in, Dh)
        return w_t.reshape(D_MODEL, N_HEADS, HEAD_DIM).transpose(1, 0, 2)

    def per_head_b(b):     # (D,) -> (H, 1, Dh)
        return b.reshape(N_HEADS, 1, HEAD_DIM)

    wqkv = jnp.concatenate(
        [per_head_w(params["wq"].T / SCALE),
         per_head_w(params["wk"].T),
         per_head_w(params["wv"].T)], axis=-1)                       # (H, D, 3Dh)
    bqkv = jnp.concatenate(
        [per_head_b(params["bq"] / SCALE),
         per_head_b(params["bk"]),
         per_head_b(params["bv"])], axis=-1)                         # (H, 1, 3Dh)
    return {
        "wqkv": wqkv,
        "bqkv": bqkv,
        "wo": params["wo"].T.reshape(N_HEADS, HEAD_DIM, D_MODEL),    # (H, Dh, D)
        "bo": params["bo"].reshape(1, D_MODEL),
        "ln1_g": params["ln1_g"].reshape(1, D_MODEL),
        "ln1_b": params["ln1_b"].reshape(1, D_MODEL),
        "w1": params["w1"].T,                                        # (D, P)
        "b1": params["b1"].reshape(1, PFF_DIM),
        "w2": params["w2"].T,                                        # (P, D)
        "b2": params["b2"].reshape(1, D_MODEL),
        "ln2_g": params["ln2_g"].reshape(1, D_MODEL),
        "ln2_b": params["ln2_b"].reshape(1, D_MODEL),
    }


def encoder_layer(src, fused, src_mask=None):
    """src: (B, S, D_MODEL) float32; fused: output of fuse_params(). -> (B, S, D_MODEL)."""
    # TODO(synk): src_mask (masked_fill with -1e10) not supported; mask=None path only.
    assert src_mask is None
    B, S, D = src.shape
    assert D == D_MODEL

    def const_spec(shape):
        n = len(shape)
        return pl.BlockSpec(shape, lambda b, _n=n: (0,) * _n)

    io_spec = pl.BlockSpec((None, S, D_MODEL), lambda b: (b, 0, 0))  # (S, D) per step

    out = pl.pallas_call(
        _encoder_layer_kernel,
        out_shape=jax.ShapeDtypeStruct((B, S, D_MODEL), jnp.float32),
        grid_spec=pltpu.PrefetchScalarGridSpec(
            num_scalar_prefetch=0,
            grid=(B,),                       # one batch element per step (pipelined)
            in_specs=[
                io_spec,                                             # src
                const_spec((N_HEADS, D_MODEL, 3 * HEAD_DIM)),        # wqkv
                const_spec((N_HEADS, 1, 3 * HEAD_DIM)),              # bqkv
                const_spec((N_HEADS, HEAD_DIM, D_MODEL)),            # wo
                const_spec((1, D_MODEL)),                            # bo
                const_spec((1, D_MODEL)), const_spec((1, D_MODEL)),  # ln1 g/b
                const_spec((D_MODEL, PFF_DIM)), const_spec((1, PFF_DIM)),  # w1, b1
                const_spec((PFF_DIM, D_MODEL)), const_spec((1, D_MODEL)),  # w2, b2
                const_spec((1, D_MODEL)), const_spec((1, D_MODEL)),  # ln2 g/b
            ],
            out_specs=io_spec,
        ),
        compiler_params=pltpu.CompilerParams(
            dimension_semantics=("parallel",),
        ),
    )(src, fused["wqkv"], fused["bqkv"], fused["wo"], fused["bo"],
      fused["ln1_g"], fused["ln1_b"], fused["w1"], fused["b1"],
      fused["w2"], fused["b2"], fused["ln2_g"], fused["ln2_b"])
    return out


def _reference(src, params):
    """Pure-JAX reference mirroring the PyTorch EncoderLayer forward (mask=None, eval)."""
    B, S, D = src.shape

    def lin(x, w, b):
        return x @ w.T + b

    def layer_norm(x, g, b):
        mu = x.mean(-1, keepdims=True)
        var = ((x - mu) ** 2).mean(-1, keepdims=True)
        return (x - mu) / jnp.sqrt(var + LN_EPS) * g + b

    Q = lin(src, params["wq"], params["bq"])
    K = lin(src, params["wk"], params["bk"])
    V = lin(src, params["wv"], params["bv"])

    def split(x):
        return x.reshape(B, S, N_HEADS, HEAD_DIM).transpose(0, 2, 1, 3)

    Qh, Kh, Vh = split(Q), split(K), split(V)
    energy = jnp.einsum("bhqd,bhkd->bhqk", Qh, Kh) / SCALE
    attention = jax.nn.softmax(energy, axis=-1)
    weighted = jnp.einsum("bhqk,bhkd->bhqd", attention, Vh)
    weighted = weighted.transpose(0, 2, 1, 3).reshape(B, S, D)
    attn_out = lin(weighted, params["wo"], params["bo"])

    h1 = layer_norm(src + attn_out, params["ln1_g"], params["ln1_b"])
    f = jax.nn.relu(lin(h1, params["w1"], params["b1"]))
    f = lin(f, params["w2"], params["b2"])
    out = layer_norm(h1 + f, params["ln2_g"], params["ln2_b"])
    return out


def _init_params(key):
    """Deterministic init matching PyTorch defaults (Linear: uniform ±1/sqrt(fan_in))."""
    ks = jax.random.split(key, 16)

    def u(k, shape, bound):
        return jax.random.uniform(k, shape, jnp.float32, -bound, bound)

    bd = 1.0 / math.sqrt(D_MODEL)
    bp = 1.0 / math.sqrt(PFF_DIM)
    return {
        "wq": u(ks[0], (D_MODEL, D_MODEL), bd), "bq": u(ks[1], (D_MODEL,), bd),
        "wk": u(ks[2], (D_MODEL, D_MODEL), bd), "bk": u(ks[3], (D_MODEL,), bd),
        "wv": u(ks[4], (D_MODEL, D_MODEL), bd), "bv": u(ks[5], (D_MODEL,), bd),
        "wo": u(ks[6], (D_MODEL, D_MODEL), bd), "bo": u(ks[7], (D_MODEL,), bd),
        "w1": u(ks[8], (PFF_DIM, D_MODEL), bd), "b1": u(ks[9], (PFF_DIM,), bd),
        "w2": u(ks[10], (D_MODEL, PFF_DIM), bp), "b2": u(ks[11], (D_MODEL,), bp),
        # LayerNorm affine params (perturbed from the 1/0 defaults to exercise the path)
        "ln1_g": 1.0 + u(ks[12], (D_MODEL,), 0.2), "ln1_b": u(ks[13], (D_MODEL,), 0.1),
        "ln2_g": 1.0 + u(ks[14], (D_MODEL,), 0.2), "ln2_b": u(ks[15], (D_MODEL,), 0.1),
    }


if __name__ == "__main__":
    B, S = 6, 8  # matches the spec's src token grid (6, 8) after embedding to d_model=16
    root = jax.random.PRNGKey(0)
    k_src, k_par = jax.random.split(root)
    src = jax.random.normal(k_src, (B, S, D_MODEL), jnp.float32)
    params = _init_params(k_par)

    # Hoisted, one-time weight fusion (not in the per-call path).
    fused = fuse_params(params)
    fused = jax.tree_util.tree_map(jax.block_until_ready, fused)

    run = jax.jit(functools.partial(encoder_layer, fused=fused))
    out = jax.block_until_ready(run(src))

    ref = _reference(src, params)
    assert out.shape == (B, S, D_MODEL)
    # Tolerance relaxed slightly vs. 1e-4 for the approx-reciprocal softmax denominator.
    assert jnp.allclose(out, ref, atol=2e-3, rtol=2e-3), "encoder layer output mismatch"

    print("KERNEL_OK")
</pallas_src>

<mosaic_0001>
module attributes {stable_mosaic.version = 11 : i64} {
  func.func @_encoder_layer_kernel(%arg0: i32, %arg1: memref<1x8x16xf32, #tpu.memory_space<vmem>>, %arg2: memref<4x16x12xf32, #tpu.memory_space<vmem>>, %arg3: memref<4x1x12xf32, #tpu.memory_space<vmem>>, %arg4: memref<4x4x16xf32, #tpu.memory_space<vmem>>, %arg5: memref<1x16xf32, #tpu.memory_space<vmem>>, %arg6: memref<1x16xf32, #tpu.memory_space<vmem>>, %arg7: memref<1x16xf32, #tpu.memory_space<vmem>>, %arg8: memref<16x32xf32, #tpu.memory_space<vmem>>, %arg9: memref<1x32xf32, #tpu.memory_space<vmem>>, %arg10: memref<32x16xf32, #tpu.memory_space<vmem>>, %arg11: memref<1x16xf32, #tpu.memory_space<vmem>>, %arg12: memref<1x16xf32, #tpu.memory_space<vmem>>, %arg13: memref<1x16xf32, #tpu.memory_space<vmem>>, %arg14: memref<1x8x16xf32, #tpu.memory_space<vmem>>) attributes {dimension_semantics = [#tpu.dimension_semantics<parallel>], iteration_bounds = array<i64: 6>, scalar_prefetch = 0 : i64, scratch_operands = 0 : i64, tpu.core_type = #tpu.core_type<tc>, window_params = [{transform_indices = @transform_0, window_bounds = array<i64: 1, 8, 16>}, {pipeline_mode = #tpu.pipeline_mode<synchronous>, transform_indices = @transform_1, window_bounds = array<i64: 4, 16, 12>}, {pipeline_mode = #tpu.pipeline_mode<synchronous>, transform_indices = @transform_2, window_bounds = array<i64: 4, 1, 12>}, {pipeline_mode = #tpu.pipeline_mode<synchronous>, transform_indices = @transform_3, window_bounds = array<i64: 4, 4, 16>}, {pipeline_mode = #tpu.pipeline_mode<synchronous>, transform_indices = @transform_4, window_bounds = array<i64: 1, 16>}, {pipeline_mode = #tpu.pipeline_mode<synchronous>, transform_indices = @transform_5, window_bounds = array<i64: 1, 16>}, {pipeline_mode = #tpu.pipeline_mode<synchronous>, transform_indices = @transform_6, window_bounds = array<i64: 1, 16>}, {pipeline_mode = #tpu.pipeline_mode<synchronous>, transform_indices = @transform_7, window_bounds = array<i64: 16, 32>}, {pipeline_mode = #tpu.pipeline_mode<synchronous>, transform_indices = @transform_8, window_bounds = array<i64: 1, 32>}, {pipeline_mode = #tpu.pipeline_mode<synchronous>, transform_indices = @transform_9, window_bounds = array<i64: 32, 16>}, {pipeline_mode = #tpu.pipeline_mode<synchronous>, transform_indices = @transform_10, window_bounds = array<i64: 1, 16>}, {pipeline_mode = #tpu.pipeline_mode<synchronous>, transform_indices = @transform_11, window_bounds = array<i64: 1, 16>}, {pipeline_mode = #tpu.pipeline_mode<synchronous>, transform_indices = @transform_12, window_bounds = array<i64: 1, 16>}, {transform_indices = @transform_13, window_bounds = array<i64: 1, 8, 16>}]} {
    %c0 = arith.constant 0 : index
    %c0_0 = arith.constant 0 : index
    %c0_1 = arith.constant 0 : index
    %0 = vector.load %arg1[%c0, %c0_0, %c0_1] : memref<1x8x16xf32, #tpu.memory_space<vmem>>, vector<1x8x16xf32>
    %1 = vector.shape_cast %0 : vector<1x8x16xf32> to vector<8x16xf32>
    %2 = vector.shape_cast %1 : vector<8x16xf32> to vector<1x8x16xf32>
    %3 = vector.broadcast %2 : vector<1x8x16xf32> to vector<4x8x16xf32>
    %c0_2 = arith.constant 0 : index
    %c0_3 = arith.constant 0 : index
    %c0_4 = arith.constant 0 : index
    %4 = vector.load %arg2[%c0_2, %c0_3, %c0_4] : memref<4x16x12xf32, #tpu.memory_space<vmem>>, vector<4x16x12xf32>
    "tpu.trace_start"() <{level = 10 : i32, message = "hsd,hde->hse"}> : () -> ()
    %cst = arith.constant dense<0.000000e+00> : vector<4x8x12xf32>
    %5 = tpu.matmul %3, %4, %cst {dimension_numbers = #tpu.dot_dimension_numbers<[2], [1], [1], [2], [0, 0, 0, 1, 1, 2], [0], [0]>} : vector<4x8x16xf32>, vector<4x16x12xf32>, vector<4x8x12xf32> -> vector<4x8x12xf32>
    "tpu.trace_stop"() : () -> ()
    %c0_5 = arith.constant 0 : index
    %c0_6 = arith.constant 0 : index
    %c0_7 = arith.constant 0 : index
    %6 = vector.load %arg3[%c0_5, %c0_6, %c0_7] : memref<4x1x12xf32, #tpu.memory_space<vmem>>, vector<4x1x12xf32>
    %7 = vector.broadcast %6 : vector<4x1x12xf32> to vector<4x8x12xf32>
    %8 = arith.addf %5, %7 : vector<4x8x12xf32>
    %9 = vector.extract_strided_slice %8 {offsets = [0, 0, 0], sizes = [4, 8, 4], strides = [1, 1, 1]} : vector<4x8x12xf32> to vector<4x8x4xf32>
    %10 = vector.extract_strided_slice %8 {offsets = [0, 0, 4], sizes = [4, 8, 4], strides = [1, 1, 1]} : vector<4x8x12xf32> to vector<4x8x4xf32>
    %11 = vector.extract_strided_slice %8 {offsets = [0, 0, 8], sizes = [4, 8, 4], strides = [1, 1, 1]} : vector<4x8x12xf32> to vector<4x8x4xf32>
    "tpu.trace_start"() <{level = 10 : i32, message = "hqd,hkd->hqk"}> : () -> ()
    %cst_8 = arith.constant dense<0.000000e+00> : vector<4x8x8xf32>
    %12 = tpu.matmul %9, %10, %cst_8 {dimension_numbers = #tpu.dot_dimension_numbers<[2], [2], [1], [1], [0, 0, 0, 1, 1, 1], [0], [0]>} : vector<4x8x4xf32>, vector<4x8x4xf32>, vector<4x8x8xf32> -> vector<4x8x8xf32>
    "tpu.trace_stop"() : () -> ()
    %cst_9 = arith.constant dense<0xFF800000> : vector<4x8xf32>
    %13 = vector.multi_reduction <maximumf>, %12, %cst_9 [2] : vector<4x8x8xf32> to vector<4x8xf32>
    %14 = vector.shape_cast %13 : vector<4x8xf32> to vector<4x8x1xf32>
    %15 = vector.broadcast %14 : vector<4x8x1xf32> to vector<4x8x8xf32>
    %16 = arith.subf %12, %15 : vector<4x8x8xf32>
    %17 = math.exp %16 : vector<4x8x8xf32>
    %cst_10 = arith.constant dense<0.000000e+00> : vector<4x8xf32>
    %18 = vector.multi_reduction <add>, %17, %cst_10 [2] : vector<4x8x8xf32> to vector<4x8xf32>
    %19 = vector.shape_cast %18 : vector<4x8xf32> to vector<4x8x1xf32>
    %20 = tpu.reciprocal %19 {approx = true} : vector<4x8x1xf32> -> vector<4x8x1xf32>
    %21 = vector.broadcast %20 : vector<4x8x1xf32> to vector<4x8x8xf32>
    %22 = arith.mulf %17, %21 : vector<4x8x8xf32>
    "tpu.trace_start"() <{level = 10 : i32, message = "hqk,hkd->hqd"}> : () -> ()
    %cst_11 = arith.constant dense<0.000000e+00> : vector<4x8x4xf32>
    %23 = tpu.matmul %22, %11, %cst_11 {dimension_numbers = #tpu.dot_dimension_numbers<[2], [1], [1], [2], [0, 0, 0, 1, 1, 2], [0], [0]>} : vector<4x8x8xf32>, vector<4x8x4xf32>, vector<4x8x4xf32> -> vector<4x8x4xf32>
    "tpu.trace_stop"() : () -> ()
    %c0_12 = arith.constant 0 : index
    %c0_13 = arith.constant 0 : index
    %c0_14 = arith.constant 0 : index
    %24 = vector.load %arg4[%c0_12, %c0_13, %c0_14] : memref<4x4x16xf32, #tpu.memory_space<vmem>>, vector<4x4x16xf32>
    "tpu.trace_start"() <{level = 10 : i32, message = "hsd,hdm->hsm"}> : () -> ()
    %cst_15 = arith.constant dense<0.000000e+00> : vector<4x8x16xf32>
    %25 = tpu.matmul %23, %24, %cst_15 {dimension_numbers = #tpu.dot_dimension_numbers<[2], [1], [1], [2], [0, 0, 0, 1, 1, 2], [0], [0]>} : vector<4x8x4xf32>, vector<4x4x16xf32>, vector<4x8x16xf32> -> vector<4x8x16xf32>
    "tpu.trace_stop"() : () -> ()
    %cst_16 = arith.constant dense<0.000000e+00> : vector<8x16xf32>
    %26 = vector.multi_reduction <add>, %25, %cst_16 [0] : vector<4x8x16xf32> to vector<8x16xf32>
    %c0_17 = arith.constant 0 : index
    %c0_18 = arith.constant 0 : index
    %27 = vector.load %arg5[%c0_17, %c0_18] : memref<1x16xf32, #tpu.memory_space<vmem>>, vector<1x16xf32>
    %28 = vector.broadcast %27 : vector<1x16xf32> to vector<8x16xf32>
    %29 = arith.addf %26, %28 : vector<8x16xf32>
    %30 = arith.addf %1, %29 : vector<8x16xf32>
    %cst_19 = arith.constant dense<0.000000e+00> : vector<8xf32>
    %31 = vector.multi_reduction <add>, %30, %cst_19 [1] : vector<8x16xf32> to vector<8xf32>
    %32 = vector.shape_cast %31 : vector<8xf32> to vector<8x1xf32>
    %cst_20 = arith.constant 1.600000e+01 : f32
    %33 = vector.broadcast %cst_20 : f32 to vector<8x1xf32>
    %34 = arith.divf %32, %33 : vector<8x1xf32>
    %35 = vector.broadcast %34 : vector<8x1xf32> to vector<8x16xf32>
    %36 = arith.subf %30, %35 : vector<8x16xf32>
    %37 = arith.mulf %36, %36 : vector<8x16xf32>
    %cst_21 = arith.constant dense<0.000000e+00> : vector<8xf32>
    %38 = vector.multi_reduction <add>, %37, %cst_21 [1] : vector<8x16xf32> to vector<8xf32>
    %39 = vector.shape_cast %38 : vector<8xf32> to vector<8x1xf32>
    %cst_22 = arith.constant 1.600000e+01 : f32
    %40 = vector.broadcast %cst_22 : f32 to vector<8x1xf32>
    %41 = arith.divf %39, %40 : vector<8x1xf32>
    %42 = vector.broadcast %34 : vector<8x1xf32> to vector<8x16xf32>
    %43 = arith.subf %30, %42 : vector<8x16xf32>
    %cst_23 = arith.constant 9.99999974E-6 : f32
    %44 = vector.broadcast %cst_23 : f32 to vector<8x1xf32>
    %45 = arith.addf %41, %44 : vector<8x1xf32>
    %46 = math.rsqrt %45 : vector<8x1xf32>
    %47 = vector.broadcast %46 : vector<8x1xf32> to vector<8x16xf32>
    %48 = arith.mulf %43, %47 : vector<8x16xf32>
    %c0_24 = arith.constant 0 : index
    %c0_25 = arith.constant 0 : index
    %49 = vector.load %arg6[%c0_24, %c0_25] : memref<1x16xf32, #tpu.memory_space<vmem>>, vector<1x16xf32>
    %50 = vector.broadcast %49 : vector<1x16xf32> to vector<8x16xf32>
    %51 = arith.mulf %48, %50 : vector<8x16xf32>
    %c0_26 = arith.constant 0 : index
    %c0_27 = arith.constant 0 : index
    %52 = vector.load %arg7[%c0_26, %c0_27] : memref<1x16xf32, #tpu.memory_space<vmem>>, vector<1x16xf32>
    %53 = vector.broadcast %52 : vector<1x16xf32> to vector<8x16xf32>
    %54 = arith.addf %51, %53 : vector<8x16xf32>
    %c0_28 = arith.constant 0 : index
    %c0_29 = arith.constant 0 : index
    %55 = vector.load %arg8[%c0_28, %c0_29] : memref<16x32xf32, #tpu.memory_space<vmem>>, vector<16x32xf32>
    %cst_30 = arith.constant dense<0.000000e+00> : vector<8x32xf32>
    %56 = tpu.matmul %54, %55, %cst_30 {dimension_numbers = #tpu.dot_dimension_numbers<[1], [0], [0], [1], [0, 0, 1, 1], [], []>} : vector<8x16xf32>, vector<16x32xf32>, vector<8x32xf32> -> vector<8x32xf32>
    %c0_31 = arith.constant 0 : index
    %c0_32 = arith.constant 0 : index
    %57 = vector.load %arg9[%c0_31, %c0_32] : memref<1x32xf32, #tpu.memory_space<vmem>>, vector<1x32xf32>
    %58 = vector.broadcast %57 : vector<1x32xf32> to vector<8x32xf32>
    %59 = arith.addf %56, %58 : vector<8x32xf32>
    %cst_33 = arith.constant 0.000000e+00 : f32
    %60 = vector.broadcast %cst_33 : f32 to vector<8x32xf32>
    %61 = arith.maximumf %59, %60 : vector<8x32xf32>
    %c0_34 = arith.constant 0 : index
    %c0_35 = arith.constant 0 : index
    %62 = vector.load %arg10[%c0_34, %c0_35] : memref<32x16xf32, #tpu.memory_space<vmem>>, vector<32x16xf32>
    %cst_36 = arith.constant dense<0.000000e+00> : vector<8x16xf32>
    %63 = tpu.matmul %61, %62, %cst_36 {dimension_numbers = #tpu.dot_dimension_numbers<[1], [0], [0], [1], [0, 0, 1, 1], [], []>} : vector<8x32xf32>, vector<32x16xf32>, vector<8x16xf32> -> vector<8x16xf32>
    %c0_37 = arith.constant 0 : index
    %c0_38 = arith.constant 0 : index
    %64 = vector.load %arg11[%c0_37, %c0_38] : memref<1x16xf32, #tpu.memory_space<vmem>>, vector<1x16xf32>
    %65 = vector.broadcast %64 : vector<1x16xf32> to vector<8x16xf32>
    %66 = arith.addf %63, %65 : vector<8x16xf32>
    %67 = arith.addf %54, %66 : vector<8x16xf32>
    %cst_39 = arith.constant dense<0.000000e+00> : vector<8xf32>
    %68 = vector.multi_reduction <add>, %67, %cst_39 [1] : vector<8x16xf32> to vector<8xf32>
    %69 = vector.shape_cast %68 : vector<8xf32> to vector<8x1xf32>
    %cst_40 = arith.constant 1.600000e+01 : f32
    %70 = vector.broadcast %cst_40 : f32 to vector<8x1xf32>
    %71 = arith.divf %69, %70 : vector<8x1xf32>
    %72 = vector.broadcast %71 : vector<8x1xf32> to vector<8x16xf32>
    %73 = arith.subf %67, %72 : vector<8x16xf32>
    %74 = arith.mulf %73, %73 : vector<8x16xf32>
    %cst_41 = arith.constant dense<0.000000e+00> : vector<8xf32>
    %75 = vector.multi_reduction <add>, %74, %cst_41 [1] : vector<8x16xf32> to vector<8xf32>
    %76 = vector.shape_cast %75 : vector<8xf32> to vector<8x1xf32>
    %cst_42 = arith.constant 1.600000e+01 : f32
    %77 = vector.broadcast %cst_42 : f32 to vector<8x1xf32>
    %78 = arith.divf %76, %77 : vector<8x1xf32>
    %79 = vector.broadcast %71 : vector<8x1xf32> to vector<8x16xf32>
    %80 = arith.subf %67, %79 : vector<8x16xf32>
    %cst_43 = arith.constant 9.99999974E-6 : f32
    %81 = vector.broadcast %cst_43 : f32 to vector<8x1xf32>
    %82 = arith.addf %78, %81 : vector<8x1xf32>
    %83 = math.rsqrt %82 : vector<8x1xf32>
    %84 = vector.broadcast %83 : vector<8x1xf32> to vector<8x16xf32>
    %85 = arith.mulf %80, %84 : vector<8x16xf32>
    %c0_44 = arith.constant 0 : index
    %c0_45 = arith.constant 0 : index
    %86 = vector.load %arg12[%c0_44, %c0_45] : memref<1x16xf32, #tpu.memory_space<vmem>>, vector<1x16xf32>
    %87 = vector.broadcast %86 : vector<1x16xf32> to vector<8x16xf32>
    %88 = arith.mulf %85, %87 : vector<8x16xf32>
    %c0_46 = arith.constant 0 : index
    %c0_47 = arith.constant 0 : index
    %89 = vector.load %arg13[%c0_46, %c0_47] : memref<1x16xf32, #tpu.memory_space<vmem>>, vector<1x16xf32>
    %90 = vector.broadcast %89 : vector<1x16xf32> to vector<8x16xf32>
    %91 = arith.addf %88, %90 : vector<8x16xf32>
    %c0_48 = arith.constant 0 : index
    %c0_49 = arith.constant 0 : index
    %c0_50 = arith.constant 0 : index
    %92 = vector.load %arg14[%c0_48, %c0_49, %c0_50] : memref<1x8x16xf32, #tpu.memory_space<vmem>>, vector<1x8x16xf32>
    %93 = vector.shape_cast %92 : vector<1x8x16xf32> to vector<8x16xf32>
    %94 = vector.shape_cast %91 : vector<8x16xf32> to vector<1x8x16xf32>
    tpu.vector_store %arg14[%c0_48, %c0_49, %c0_50], %94 {strides = array<i32>} : memref<1x8x16xf32, #tpu.memory_space<vmem>>, vector<1x8x16xf32>,
    return
  }
  func.func @transform_0(%arg0: i32) -> (i32, i32, i32) {
    %c0_i32 = arith.constant 0 : i32
    %c0_i32_0 = arith.constant 0 : i32
    %c0_i32_1 = arith.constant 0 : i32
    return %arg0, %c0_i32, %c0_i32_0 : i32, i32, i32
  }
  func.func @transform_1(%arg0: i32) -> (i32, i32, i32) {
    %c0_i32 = arith.constant 0 : i32
    %c0_i32_0 = arith.constant 0 : i32
    %c0_i32_1 = arith.constant 0 : i32
    %c0_i32_2 = arith.constant 0 : i32
    return %c0_i32, %c0_i32_0, %c0_i32_1 : i32, i32, i32
  }
  func.func @transform_2(%arg0: i32) -> (i32, i32, i32) {
    %c0_i32 = arith.constant 0 : i32
    %c0_i32_0 = arith.constant 0 : i32
    %c0_i32_1 = arith.constant 0 : i32
    %c0_i32_2 = arith.constant 0 : i32
    return %c0_i32, %c0_i32_0, %c0_i32_1 : i32, i32, i32
  }
  func.func @transform_3(%arg0: i32) -> (i32, i32, i32) {
    %c0_i32 = arith.constant 0 : i32
    %c0_i32_0 = arith.constant 0 : i32
    %c0_i32_1 = arith.constant 0 : i32
    %c0_i32_2 = arith.constant 0 : i32
    return %c0_i32, %c0_i32_0, %c0_i32_1 : i32, i32, i32
  }
  func.func @transform_4(%arg0: i32) -> (i32, i32) {
    %c0_i32 = arith.constant 0 : i32
    %c0_i32_0 = arith.constant 0 : i32
    %c0_i32_1 = arith.constant 0 : i32
    return %c0_i32, %c0_i32_0 : i32, i32
  }
  func.func @transform_5(%arg0: i32) -> (i32, i32) {
    %c0_i32 = arith.constant 0 : i32
    %c0_i32_0 = arith.constant 0 : i32
    %c0_i32_1 = arith.constant 0 : i32
    return %c0_i32, %c0_i32_0 : i32, i32
  }
  func.func @transform_6(%arg0: i32) -> (i32, i32) {
    %c0_i32 = arith.constant 0 : i32
    %c0_i32_0 = arith.constant 0 : i32
    %c0_i32_1 = arith.constant 0 : i32
    return %c0_i32, %c0_i32_0 : i32, i32
  }
  func.func @transform_7(%arg0: i32) -> (i32, i32) {
    %c0_i32 = arith.constant 0 : i32
    %c0_i32_0 = arith.constant 0 : i32
    %c0_i32_1 = arith.constant 0 : i32
    return %c0_i32, %c0_i32_0 : i32, i32
  }
  func.func @transform_8(%arg0: i32) -> (i32, i32) {
    %c0_i32 = arith.constant 0 : i32
    %c0_i32_0 = arith.constant 0 : i32
    %c0_i32_1 = arith.constant 0 : i32
    return %c0_i32, %c0_i32_0 : i32, i32
  }
  func.func @transform_9(%arg0: i32) -> (i32, i32) {
    %c0_i32 = arith.constant 0 : i32
    %c0_i32_0 = arith.constant 0 : i32
    %c0_i32_1 = arith.constant 0 : i32
    return %c0_i32, %c0_i32_0 : i32, i32
  }
  func.func @transform_10(%arg0: i32) -> (i32, i32) {
    %c0_i32 = arith.constant 0 : i32
    %c0_i32_0 = arith.constant 0 : i32
    %c0_i32_1 = arith.constant 0 : i32
    return %c0_i32, %c0_i32_0 : i32, i32
  }
  func.func @transform_11(%arg0: i32) -> (i32, i32) {
    %c0_i32 = arith.constant 0 : i32
    %c0_i32_0 = arith.constant 0 : i32
    %c0_i32_1 = arith.constant 0 : i32
    return %c0_i32, %c0_i32_0 : i32, i32
  }
  func.func @transform_12(%arg0: i32) -> (i32, i32) {
    %c0_i32 = arith.constant 0 : i32
    %c0_i32_0 = arith.constant 0 : i32
    %c0_i32_1 = arith.constant 0 : i32
    return %c0_i32, %c0_i32_0 : i32, i32
  }
  func.func @transform_13(%arg0: i32) -> (i32, i32, i32) {
    %c0_i32 = arith.constant 0 : i32
    %c0_i32_0 = arith.constant 0 : i32
    %c0_i32_1 = arith.constant 0 : i32
    return %arg0, %c0_i32, %c0_i32_0 : i32, i32, i32
  }
}

</mosaic_0001>

<llo_original>
// kernel: encoder_layer.1
$region0: #{encoder_layer.1}
  #allocation0 [shape = 'u32[]', space=smem, size = 0x4, offset = 0x4, fixed_abs, tag = 'smem constant byte address 0x4 - core index']
  #allocation1 [shape = 'u32[144,128]{1,0:T(1,128)}', space=vmem, size = 0x12000, scoped, tag = 'internal scratch']
  %s0 = inlined_call_operand.hbm [shape: f32[6,8,16], index: 0, kind: input, shape index: {}]
  %s1 = inlined_call_operand.hbm [shape: f32[4,16,12], index: 1, kind: input, shape index: {}]
  %s2 = inlined_call_operand.hbm [shape: f32[4,1,12], index: 2, kind: input, shape index: {}]
  %s3 = inlined_call_operand.hbm [shape: f32[4,4,16], index: 3, kind: input, shape index: {}]
  %s4 = inlined_call_operand.hbm [shape: f32[1,16], index: 4, kind: input, shape index: {}]
  %s5 = inlined_call_operand.hbm [shape: f32[1,16], index: 5, kind: input, shape index: {}]
  %s6 = inlined_call_operand.hbm [shape: f32[1,16], index: 6, kind: input, shape index: {}]
  %s7 = inlined_call_operand.hbm [shape: f32[16,32], index: 7, kind: input, shape index: {}]
  %s8 = inlined_call_operand.hbm [shape: f32[1,32], index: 8, kind: input, shape index: {}]
  %s9 = inlined_call_operand.vmem [shape: f32[32,16], index: 9, kind: input, shape index: {}]
  %s10 = inlined_call_operand.vmem [shape: f32[1,16], index: 10, kind: input, shape index: {}]
  %s11 = inlined_call_operand.vmem [shape: f32[1,16], index: 11, kind: input, shape index: {}]
  %s12 = inlined_call_operand.vmem [shape: f32[1,16], index: 12, kind: input, shape index: {}]
  %s13 = inlined_call_operand.hbm [shape: f32[6,8,16], index: 13, kind: output, shape index: {}]
  %s14 = sld [smem:[#allocation0]]
  $region121: #{encoder_layer.1} parent=0
    _
  %s16 = ssub.s32 1, %s14
  %s17 = scalar_select 0, %s16, %s14
  $region1: #{encoder_layer.1} parent=0
    #allocation2 [shape = 'u8[8192]{0}', space=vmem, size = 0x2000, scoped, tag = 'input window, operand 0']
    #allocation3 [shape = 's32[2]{0}', space=sflag, size = 0x8, scoped, tag = 'scoped memory for encoder_layer.1']
    #allocation4 [shape = 's32[2]{0}', space=sflag, size = 0x8, scoped, tag = 'scoped memory for encoder_layer.1']
    #allocation5 [shape = 'u8[32768]{0}', space=vmem, size = 0x8000, scoped, tag = 'input window, operand 1, single buffered']
    #allocation6 [shape = 's32[1]{0}', space=sflag, size = 0x4, scoped, tag = 'scoped memory for encoder_layer.1']
    #allocation7 [shape = 'u8[2048]{0}', space=vmem, size = 0x800, scoped, tag = 'input window, operand 2, single buffered']
    #allocation8 [shape = 'u8[8192]{0}', space=vmem, size = 0x2000, scoped, tag = 'input window, operand 3, single buffered']
    #allocation9 [shape = 's32[1]{0}', space=sflag, size = 0x4, scoped, tag = 'scoped memory for encoder_layer.1']
    #allocation10 [shape = 'u8[512]{0}', space=vmem, size = 0x400, scoped, tag = 'input window, operand 4, single buffered']
    #allocation11 [shape = 'u8[512]{0}', space=vmem, size = 0x400, scoped, tag = 'input window, operand 5, single buffered']
    #allocation12 [shape = 's32[1]{0}', space=sflag, size = 0x4, scoped, tag = 'scoped memory for encoder_layer.1']
    #allocation13 [shape = 'u8[512]{0}', space=vmem, size = 0x400, scoped, tag = 'input window, operand 6, single buffered']
    #allocation14 [shape = 'u8[8192]{0}', space=vmem, size = 0x2000, scoped, tag = 'input window, operand 7, single buffered']
    #allocation15 [shape = 's32[1]{0}', space=sflag, size = 0x4, scoped, tag = 'scoped memory for encoder_layer.1']
    #allocation16 [shape = 'u8[512]{0}', space=vmem, size = 0x400, scoped, tag = 'input window, operand 8, single buffered']
    #allocation17 [shape = 'u8[8192]{0}', space=vmem, size = 0x2000, scoped, tag = 'output window, operand 0']
    %18 = vsyncpa [#allocation3], 0
    %s19 = scalar_lea.sflag [#allocation3], 1
    %20 = vsyncpa %s19, 0
    %21 = vsyncpa [#allocation6], 0
    %22 = vsyncpa [#allocation9], 0
    %23 = vsyncpa [#allocation12], 0
    %24 = vsyncpa [#allocation15], 0
    %25 = vsyncpa [#allocation4], 0
    %s26 = scalar_lea.sflag [#allocation4], 1
    %27 = vsyncpa %s26, 0
    loop: start=0, step=1, limit=8
    $region2: #{encoder_layer.1} parent=1 // loop_pre_header
      _
    $region3: #{encoder_layer.1} parent=1 // loop_header
      %s29 = sphi 0, %s33
      %p30 = scmp.ge.s32.totalorder %s29, 8
      %s39 = sphi 0, %s41
      %s42 = sphi 0, %s39
      %s43 = sphi 0, %s42
      %s59 = sphi 0, %s43
      %s63 = sphi 0, %s63
      %s65 = sphi 0, %s63
      %s66 = sphi 0, %s65
      %s80 = sphi 0, %s66
      %s84 = sphi 0, %s84
      %s86 = sphi 0, %s84
      %s87 = sphi 0, %s86
      %s101 = sphi 0, %s87
      %s105 = sphi 0, %s105
      %s107 = sphi 0, %s105
      %s108 = sphi 0, %s107
      %s122 = sphi 0, %s108
      %s126 = sphi 0, %s126
      %s128 = sphi 0, %s126
      %s129 = sphi 0, %s128
      %s143 = sphi 0, %s129
      %s147 = sphi 0, %s147
      %s149 = sphi 0, %s147
      %s150 = sphi 0, %s149
      %s164 = sphi 0, %s150
      %s168 = sphi 0, %s168
      %s170 = sphi 0, %s168
      %s171 = sphi 0, %s170
      %s185 = sphi 0, %s171
      %s189 = sphi 0, %s189
      %s191 = sphi 0, %s189
      %s192 = sphi 0, %s191
      %s206 = sphi 0, %s192
      %s210 = sphi 0, %s210
      %s212 = sphi 0, %s210
      %s213 = sphi 0, %s212
      %s227 = sphi 0, %s213
      %s231 = sphi 0, %s231
      %s233 = sphi 0, %s231
      %s234 = sphi 0, %s233
      %s248 = sphi 0, %s234
      %s252 = sphi 0, %s252
      %s254 = sphi 0, %s252
      %s255 = sphi 0, %s254
      %s269 = sphi 0, %s255
      %s273 = sphi 0, %s273
      %s275 = sphi 0, %s273
      %s276 = sphi 0, %s275
      %s290 = sphi 0, %s276
      %s294 = sphi 0, %s294
      %s296 = sphi 0, %s294
      %s297 = sphi 0, %s296
      %s311 = sphi 0, %s297
      %s317 = sphi 0, %s319
      %s320 = sphi 0, %s317
      %s321 = sphi 0, %s320
      %s337 = sphi 0, %s321
    $region4: #{encoder_layer.1} parent=1 // loop_header_branch
      %32 = sbr.rel (%p30) target = $region8
    $region5: #{encoder_layer.1} parent=1 // loop_body
      %s34 = ssub.s32 %s29, 1
      %s35 = ssub.s32 %s29, 2
      %s36 = sadd.s32 %s29, 1
      %s37 = ssub.s32 %s29, %s36
      %p38 = scmp.eq.s32.totalorder %s37, 0
      %s40 = sadd.s32 %s39, 1
      %s41 = scalar_select %p38, %s39, %s40
      %p44 = pneg %p38
      %p45 = scmp.eq.s32.totalorder %s29, 5
      %p46 = por %p44, %p45
      %p47 = scmp.ne.s32.totalorder %s39, %s42
      %p48 = scmp.eq.s32.totalorder %s29, 0
      %p49 = por %p47, %p48
      %p50 = scmp.ne.s32.totalorder %s39, %s42
      %p51 = scmp.eq.s32.totalorder %s34, 5
      %p52 = por %p50, %p51
      %p53 = scmp.ne.s32.totalorder %s42, %s43
      %p54 = scmp.eq.s32.totalorder %s34, 0
      %p55 = por %p53, %p54
      %p56 = scmp.ne.s32.totalorder %s42, %s43
      %p57 = scmp.eq.s32.totalorder %s35, 5
      %p58 = por %p56, %p57
      %p60 = scmp.ne.s32.totalorder %s43, %s59
      %p61 = scmp.eq.s32.totalorder %s35, 0
      %p62 = por %p60, %p61
      %s64 = sadd.s32 %s63, 1
      %p67 = scmp.eq.s32.totalorder %s29, 5
      %p68 = scmp.ne.s32.totalorder %s63, %s65
      %p69 = scmp.eq.s32.totalorder %s29, 0
      %p70 = por %p68, %p69
      %p71 = scmp.ne.s32.totalorder %s63, %s65
      %p72 = scmp.eq.s32.totalorder %s34, 5
      %p73 = por %p71, %p72
      %p74 = scmp.ne.s32.totalorder %s65, %s66
      %p75 = scmp.eq.s32.totalorder %s34, 0
      %p76 = por %p74, %p75
      %p77 = scmp.ne.s32.totalorder %s65, %s66
      %p78 = scmp.eq.s32.totalorder %s35, 5
      %p79 = por %p77, %p78
      %p81 = scmp.ne.s32.totalorder %s66, %s80
      %p82 = scmp.eq.s32.totalorder %s35, 0
      %p83 = por %p81, %p82
      %s85 = sadd.s32 %s84, 1
      %p88 = scmp.eq.s32.totalorder %s29, 5
      %p89 = scmp.ne.s32.totalorder %s84, %s86
      %p90 = scmp.eq.s32.totalorder %s29, 0
      %p91 = por %p89, %p90
      %p92 = scmp.ne.s32.totalorder %s84, %s86
      %p93 = scmp.eq.s32.totalorder %s34, 5
      %p94 = por %p92, %p93
      %p95 = scmp.ne.s32.totalorder %s86, %s87
      %p96 = scmp.eq.s32.totalorder %s34, 0
      %p97 = por %p95, %p96
      %p98 = scmp.ne.s32.totalorder %s86, %s87
      %p99 = scmp.eq.s32.totalorder %s35, 5
      %p100 = por %p98, %p99
      %p102 = scmp.ne.s32.totalorder %s87, %s101
      %p103 = scmp.eq.s32.totalorder %s35, 0
      %p104 = por %p102, %p103
      %s106 = sadd.s32 %s105, 1
      %p109 = scmp.eq.s32.totalorder %s29, 5
      %p110 = scmp.ne.s32.totalorder %s105, %s107
      %p111 = scmp.eq.s32.totalorder %s29, 0
      %p112 = por %p110, %p111
      %p113 = scmp.ne.s32.totalorder %s105, %s107
      %p114 = scmp.eq.s32.totalorder %s34, 5
      %p115 = por %p113, %p114
      %p116 = scmp.ne.s32.totalorder %s107, %s108
      %p117 = scmp.eq.s32.totalorder %s34, 0
      %p118 = por %p116, %p117
      %p119 = scmp.ne.s32.totalorder %s107, %s108
      %p120 = scmp.eq.s32.totalorder %s35, 5
      %p121 = por %p119, %p120
      %p123 = scmp.ne.s32.totalorder %s108, %s122
      %p124 = scmp.eq.s32.totalorder %s35, 0
      %p125 = por %p123, %p124
      %s127 = sadd.s32 %s126, 1
      %p130 = scmp.eq.s32.totalorder %s29, 5
      %p131 = scmp.ne.s32.totalorder %s126, %s128
      %p132 = scmp.eq.s32.totalorder %s29, 0
      %p133 = por %p131, %p132
      %p134 = scmp.ne.s32.totalorder %s126, %s128
      %p135 = scmp.eq.s32.totalorder %s34, 5
      %p136 = por %p134, %p135
      %p137 = scmp.ne.s32.totalorder %s128, %s129
      %p138 = scmp.eq.s32.totalorder %s34, 0
      %p139 = por %p137, %p138
      %p140 = scmp.ne.s32.totalorder %s128, %s129
      %p141 = scmp.eq.s32.totalorder %s35, 5
      %p142 = por %p140, %p141
      %p144 = scmp.ne.s32.totalorder %s129, %s143
      %p145 = scmp.eq.s32.totalorder %s35, 0
      %p146 = por %p144, %p145
      %s148 = sadd.s32 %s147, 1
      %p151 = scmp.eq.s32.totalorder %s29, 5
      %p152 = scmp.ne.s32.totalorder %s147, %s149
      %p153 = scmp.eq.s32.totalorder %s29, 0
      %p154 = por %p152, %p153
      %p155 = scmp.ne.s32.totalorder %s147, %s149
      %p156 = scmp.eq.s32.totalorder %s34, 5
      %p157 = por %p155, %p156
      %p158 = scmp.ne.s32.totalorder %s149, %s150
      %p159 = scmp.eq.s32.totalorder %s34, 0
      %p160 = por %p158, %p159
      %p161 = scmp.ne.s32.totalorder %s149, %s150
      %p162 = scmp.eq.s32.totalorder %s35, 5
      %p163 = por %p161, %p162
      %p165 = scmp.ne.s32.totalorder %s150, %s164
      %p166 = scmp.eq.s32.totalorder %s35, 0
      %p167 = por %p165, %p166
      %s169 = sadd.s32 %s168, 1
      %p172 = scmp.eq.s32.totalorder %s29, 5
      %p173 = scmp.ne.s32.totalorder %s168, %s170
      %p174 = scmp.eq.s32.totalorder %s29, 0
      %p175 = por %p173, %p174
      %p176 = scmp.ne.s32.totalorder %s168, %s170
      %p177 = scmp.eq.s32.totalorder %s34, 5
      %p178 = por %p176, %p177
      %p179 = scmp.ne.s32.totalorder %s170, %s171
      %p180 = scmp.eq.s32.totalorder %s34, 0
      %p181 = por %p179, %p180
      %p182 = scmp.ne.s32.totalorder %s170, %s171
      %p183 = scmp.eq.s32.totalorder %s35, 5
      %p184 = por %p182, %p183
      %p186 = scmp.ne.s32.totalorder %s171, %s185
      %p187 = scmp.eq.s32.totalorder %s35, 0
      %p188 = por %p186, %p187
      %s190 = sadd.s32 %s189, 1
      %p193 = scmp.eq.s32.totalorder %s29, 5
      %p194 = scmp.ne.s32.totalorder %s189, %s191
      %p195 = scmp.eq.s32.totalorder %s29, 0
      %p196 = por %p194, %p195
      %p197 = scmp.ne.s32.totalorder %s189, %s191
      %p198 = scmp.eq.s32.totalorder %s34, 5
      %p199 = por %p197, %p198
      %p200 = scmp.ne.s32.totalorder %s191, %s192
      %p201 = scmp.eq.s32.totalorder %s34, 0
      %p202 = por %p200, %p201
      %p203 = scmp.ne.s32.totalorder %s191, %s192
      %p204 = scmp.eq.s32.totalorder %s35, 5
      %p205 = por %p203, %p204
      %p207 = scmp.ne.s32.totalorder %s192, %s206
      %p208 = scmp.eq.s32.totalorder %s35, 0
      %p209 = por %p207, %p208
      %s211 = sadd.s32 %s210, 1
      %p214 = scmp.eq.s32.totalorder %s29, 5
      %p215 = scmp.ne.s32.totalorder %s210, %s212
      %p216 = scmp.eq.s32.totalorder %s29, 0
      %p217 = por %p215, %p216
      %p218 = scmp.ne.s32.totalorder %s210, %s212
      %p219 = scmp.eq.s32.totalorder %s34, 5
      %p220 = por %p218, %p219
      %p221 = scmp.ne.s32.totalorder %s212, %s213
      %p222 = scmp.eq.s32.totalorder %s34, 0
      %p223 = por %p221, %p222
      %p224 = scmp.ne.s32.totalorder %s212, %s213
      %p225 = scmp.eq.s32.totalorder %s35, 5
      %p226 = por %p224, %p225
      %p228 = scmp.ne.s32.totalorder %s213, %s227
      %p229 = scmp.eq.s32.totalorder %s35, 0
      %p230 = por %p228, %p229
      %s232 = sadd.s32 %s231, 1
      %p235 = scmp.eq.s32.totalorder %s29, 5
      %p236 = scmp.ne.s32.totalorder %s231, %s233
      %p237 = scmp.eq.s32.totalorder %s29, 0
      %p238 = por %p236, %p237
      %p239 = scmp.ne.s32.totalorder %s231, %s233
      %p240 = scmp.eq.s32.totalorder %s34, 5
      %p241 = por %p239, %p240
      %p242 = scmp.ne.s32.totalorder %s233, %s234
      %p243 = scmp.eq.s32.totalorder %s34, 0
      %p244 = por %p242, %p243
      %p245 = scmp.ne.s32.totalorder %s233, %s234
      %p246 = scmp.eq.s32.totalorder %s35, 5
      %p247 = por %p245, %p246
      %p249 = scmp.ne.s32.totalorder %s234, %s248
      %p250 = scmp.eq.s32.totalorder %s35, 0
      %p251 = por %p249, %p250
      %s253 = sadd.s32 %s252, 1
      %p256 = scmp.eq.s32.totalorder %s29, 5
      %p257 = scmp.ne.s32.totalorder %s252, %s254
      %p258 = scmp.eq.s32.totalorder %s29, 0
      %p259 = por %p257, %p258
      %p260 = scmp.ne.s32.totalorder %s252, %s254
      %p261 = scmp.eq.s32.totalorder %s34, 5
      %p262 = por %p260, %p261
      %p263 = scmp.ne.s32.totalorder %s254, %s255
      %p264 = scmp.eq.s32.totalorder %s34, 0
      %p265 = por %p263, %p264
      %p266 = scmp.ne.s32.totalorder %s254, %s255
      %p267 = scmp.eq.s32.totalorder %s35, 5
      %p268 = por %p266, %p267
      %p270 = scmp.ne.s32.totalorder %s255, %s269
      %p271 = scmp.eq.s32.totalorder %s35, 0
      %p272 = por %p270, %p271
      %s274 = sadd.s32 %s273, 1
      %p277 = scmp.eq.s32.totalorder %s29, 5
      %p278 = scmp.ne.s32.totalorder %s273, %s275
      %p279 = scmp.eq.s32.totalorder %s29, 0
      %p280 = por %p278, %p279
      %p281 = scmp.ne.s32.totalorder %s273, %s275
      %p282 = scmp.eq.s32.totalorder %s34, 5
      %p283 = por %p281, %p282
      %p284 = scmp.ne.s32.totalorder %s275, %s276
      %p285 = scmp.eq.s32.totalorder %s34, 0
      %p286 = por %p284, %p285
      %p287 = scmp.ne.s32.totalorder %s275, %s276
      %p288 = scmp.eq.s32.totalorder %s35, 5
      %p289 = por %p287, %p288
      %p291 = scmp.ne.s32.totalorder %s276, %s290
      %p292 = scmp.eq.s32.totalorder %s35, 0
      %p293 = por %p291, %p292
      %s295 = sadd.s32 %s294, 1
      %p298 = scmp.eq.s32.totalorder %s29, 5
      %p299 = scmp.ne.s32.totalorder %s294, %s296
      %p300 = scmp.eq.s32.totalorder %s29, 0
      %p301 = por %p299, %p300
      %p302 = scmp.ne.s32.totalorder %s294, %s296
      %p303 = scmp.eq.s32.totalorder %s34, 5
      %p304 = por %p302, %p303
      %p305 = scmp.ne.s32.totalorder %s296, %s297
      %p306 = scmp.eq.s32.totalorder %s34, 0
      %p307 = por %p305, %p306
      %p308 = scmp.ne.s32.totalorder %s296, %s297
      %p309 = scmp.eq.s32.totalorder %s35, 5
      %p310 = por %p308, %p309
      %p312 = scmp.ne.s32.totalorder %s297, %s311
      %p313 = scmp.eq.s32.totalorder %s35, 0
      %p314 = por %p312, %p313
      %s315 = ssub.s32 %s29, %s36
      %p316 = scmp.eq.s32.totalorder %s315, 0
      %s318 = sadd.s32 %s317, 1
      %s319 = scalar_select %p316, %s317, %s318
      %p322 = pneg %p316
      %p323 = scmp.eq.s32.totalorder %s29, 5
      %p324 = por %p322, %p323
      %p325 = scmp.ne.s32.totalorder %s317, %s320
      %p326 = scmp.eq.s32.totalorder %s29, 0
      %p327 = por %p325, %p326
      %p328 = scmp.ne.s32.totalorder %s317, %s320
      %p329 = scmp.eq.s32.totalorder %s34, 5
      %p330 = por %p328, %p329
      %p331 = scmp.ne.s32.totalorder %s320, %s321
      %p332 = scmp.eq.s32.totalorder %s34, 0
      %p333 = por %p331, %p332
      %p334 = scmp.ne.s32.totalorder %s320, %s321
      %p335 = scmp.eq.s32.totalorder %s35, 5
      %p336 = por %p334, %p335
      %p338 = scmp.ne.s32.totalorder %s321, %s337
      %p339 = scmp.eq.s32.totalorder %s35, 0
      %p340 = por %p338, %p339
      %p341 = scmp.le.s32.totalorder 1, %s29
      %p342 = scmp.lt.s32.totalorder %s29, 7
      %p343 = pnand %p341, %p342
      %p344 = pneg %p343
      // Predicated region
      $region9: #{encoder_layer.1} parent=5 // pred_check
        _
      $region10: #{encoder_layer.1} parent=5 // pred_check_branch
        %346 = sbr.rel (%p343) target = $region12
      $region11: #{encoder_layer.1} parent=5 // pred_region
        %s347 = ssub.s32 %s29, 1
        // Predicated region
        $region13: #{encoder_layer.1} parent=11 // pred_check
          %p348 = pneg %p76
        $region14: #{encoder_layer.1} parent=11 // pred_check_branch
          %350 = sbr.rel (%p348) target = $region16
        $region15: #{encoder_layer.1} parent=11 // pred_region
          %s352 = ssub.s32 1024, 1024
          %353 = vsyncadd [#allocation6], %s352
          %s354 = sshll.u32 [#allocation5], 4
          %s355 = int_to_ptr.vmem [resolvable:$true] %s354
          %360 = dma.hbm_to_vmem [thread:$0]  %s1, 1024, %s355, [#allocation6], 128, 128, 8
        $region16: #{encoder_layer.1} parent=11 // pred_fallthru
          _
        // Predicated region
        $region17: #{encoder_layer.1} parent=11 // pred_check
          %p361 = pneg %p97
        $region18: #{encoder_layer.1} parent=11 // pred_check_branch
          %363 = sbr.rel (%p361) target = $region20
        $region19: #{encoder_layer.1} parent=11 // pred_region
          %s365 = ssub.s32 64, 64
          %366 = vsyncadd [#allocation6], %s365
          %s367 = sshll.u32 [#allocation7], 4
          %s368 = int_to_ptr.vmem [resolvable:$true] %s367
          %373 = dma.hbm_to_vmem [thread:$0]  %s2, 64, %s368, [#allocation6], 16, 16, 1
        $region20: #{encoder_layer.1} parent=11 // pred_fallthru
          _
        // Predicated region
        $region21: #{encoder_layer.1} parent=11 // pred_check
          %p374 = pneg %p118
        $region22: #{encoder_layer.1} parent=11 // pred_check_branch
          %376 = sbr.rel (%p374) target = $region24
        $region23: #{encoder_layer.1} parent=11 // pred_region
          %s378 = ssub.s32 256, 256
          %379 = vsyncadd [#allocation9], %s378
          %s380 = sshll.u32 [#allocation8], 4
          %s381 = int_to_ptr.vmem [resolvable:$true] %s380
          %386 = dma.hbm_to_vmem [thread:$0]  %s3, 256, %s381, [#allocation9], 64, 64, 4
        $region24: #{encoder_layer.1} parent=11 // pred_fallthru
          _
        // Predicated region
        $region25: #{encoder_layer.1} parent=11 // pred_check
          %p387 = pneg %p139
        $region26: #{encoder_layer.1} parent=11 // pred_check_branch
          %389 = sbr.rel (%p387) target = $region28
        $region27: #{encoder_layer.1} parent=11 // pred_region
          %s391 = ssub.s32 16, 16
          %392 = vsyncadd [#allocation9], %s391
          %s394 = sshll.u32 [#allocation10], 4
          %s395 = int_to_ptr.vmem [resolvable:$true] %s394
          %397 = dma.hbm_to_vmem [thread:$0]  %s4, 16, %s395, [#allocation9]
        $region28: #{encoder_layer.1} parent=11 // pred_fallthru
          _
        // Predicated region
        $region29: #{encoder_layer.1} parent=11 // pred_check
          %p398 = pneg %p160
        $region30: #{encoder_layer.1} parent=11 // pred_check_branch
          %400 = sbr.rel (%p398) target = $region32
        $region31: #{encoder_layer.1} parent=11 // pred_region
          %s402 = ssub.s32 16, 16
          %403 = vsyncadd [#allocation12], %s402
          %s405 = sshll.u32 [#allocation11], 4
          %s406 = int_to_ptr.vmem [resolvable:$true] %s405
          %408 = dma.hbm_to_vmem [thread:$0]  %s5, 16, %s406, [#allocation12]
        $region32: #{encoder_layer.1} parent=11 // pred_fallthru
          _
        // Predicated region
        $region33: #{encoder_layer.1} parent=11 // pred_check
          %p409 = pneg %p181
        $region34: #{encoder_layer.1} parent=11 // pred_check_branch
          %411 = sbr.rel (%p409) target = $region36
        $region35: #{encoder_layer.1} parent=11 // pred_region
          %s413 = ssub.s32 16, 16
          %414 = vsyncadd [#allocation12], %s413
          %s416 = sshll.u32 [#allocation13], 4
          %s417 = int_to_ptr.vmem [resolvable:$true] %s416
          %419 = dma.hbm_to_vmem [thread:$0]  %s6, 16, %s417, [#allocation12]
        $region36: #{encoder_layer.1} parent=11 // pred_fallthru
          _
        // Predicated region
        $region37: #{encoder_layer.1} parent=11 // pred_check
          %p420 = pneg %p202
        $region38: #{encoder_layer.1} parent=11 // pred_check_branch
          %422 = sbr.rel (%p420) target = $region40
        $region39: #{encoder_layer.1} parent=11 // pred_region
          %s424 = ssub.s32 256, 256
          %425 = vsyncadd [#allocation15], %s424
          %s426 = sshll.u32 [#allocation14], 4
          %s427 = int_to_ptr.vmem [resolvable:$true] %s426
          %432 = dma.hbm_to_vmem [thread:$0]  %s7, 256, %s427, [#allocation15], 128, 128, 8
        $region40: #{encoder_layer.1} parent=11 // pred_fallthru
          _
        // Predicated region
        $region41: #{encoder_layer.1} parent=11 // pred_check
          %p433 = pneg %p223
        $region42: #{encoder_layer.1} parent=11 // pred_check_branch
          %435 = sbr.rel (%p433) target = $region44
        $region43: #{encoder_layer.1} parent=11 // pred_region
          %s437 = ssub.s32 16, 16
          %438 = vsyncadd [#allocation15], %s437
          %s440 = sshll.u32 [#allocation16], 4
          %s441 = int_to_ptr.vmem [resolvable:$true] %s440
          %443 = dma.hbm_to_vmem [thread:$0]  %s8, 16, %s441, [#allocation15]
        $region44: #{encoder_layer.1} parent=11 // pred_fallthru
          _
        // Predicated region
        $region45: #{encoder_layer.1} parent=11 // pred_check
          %p444 = pneg %p244
        $region46: #{encoder_layer.1} parent=11 // pred_check_branch
          %446 = sbr.rel (%p444) target = $region48
        $region47: #{encoder_layer.1} parent=11 // pred_region
          _
        $region48: #{encoder_layer.1} parent=11 // pred_fallthru
          _
        // Predicated region
        $region49: #{encoder_layer.1} parent=11 // pred_check
          %p447 = pneg %p265
        $region50: #{encoder_layer.1} parent=11 // pred_check_branch
          %449 = sbr.rel (%p447) target = $region52
        $region51: #{encoder_layer.1} parent=11 // pred_region
          _
        $region52: #{encoder_layer.1} parent=11 // pred_fallthru
          _
        // Predicated region
        $region53: #{encoder_layer.1} parent=11 // pred_check
          %p450 = pneg %p286
        $region54: #{encoder_layer.1} parent=11 // pred_check_branch
          %452 = sbr.rel (%p450) target = $region56
        $region55: #{encoder_layer.1} parent=11 // pred_region
          _
        $region56: #{encoder_layer.1} parent=11 // pred_fallthru
          _
        // Predicated region
        $region57: #{encoder_layer.1} parent=11 // pred_check
          %p453 = pneg %p307
        $region58: #{encoder_layer.1} parent=11 // pred_check_branch
          %455 = sbr.rel (%p453) target = $region60
        $region59: #{encoder_layer.1} parent=11 // pred_region
          _
        $region60: #{encoder_layer.1} parent=11 // pred_fallthru
          _
      $region12: #{encoder_layer.1} parent=5 // pred_fallthru
        _
      %p456 = scmp.lt.s32.totalorder %s29, 6
      // Predicated region
      $region61: #{encoder_layer.1} parent=5 // pred_check
        %p457 = pneg %p456
      $region62: #{encoder_layer.1} parent=5 // pred_check_branch
        %459 = sbr.rel (%p457) target = $region64
      $region63: #{encoder_layer.1} parent=5 // pred_region
        // Predicated region
        $region65: #{encoder_layer.1} parent=63 // pred_check
          %p460 = pneg %p49
        $region66: #{encoder_layer.1} parent=63 // pred_check_branch
          %462 = sbr.rel (%p460) target = $region68
        $region67: #{encoder_layer.1} parent=63 // pred_region
          %s463 = sand.u32 %s39, 1
          %s464 = scalar_lea.sflag [#allocation3], %s463
          %s465 = sand.u32 %s39, 1
          %s466 = smul.addr %s465, 8
          %s467 = scalar_lea.vmem [#allocation2], %s466
          %s469 = ssub.s32 128, 128
          %470 = vsyncadd %s464, %s469
          %s471 = smul.addr %s29, 128
          %s472 = scalar_lea.hbm %s0, %s471
          %s474 = sshll.u32 %s467, 4
          %s475 = int_to_ptr.vmem [resolvable:$true] %s474
          %477 = dma.hbm_to_vmem [thread:$0]  %s472, 128, %s475, %s464
        $region68: #{encoder_layer.1} parent=63 // pred_fallthru
          _
      $region64: #{encoder_layer.1} parent=5 // pred_fallthru
        _
      %p478 = scmp.le.s32.totalorder 1, %s29
      %p479 = scmp.lt.s32.totalorder %s29, 7
      %p480 = pnand %p478, %p479
      %p481 = pneg %p480
      // Predicated region
      $region69: #{encoder_layer.1} parent=5 // pred_check
        _
      $region70: #{encoder_layer.1} parent=5 // pred_check_branch
        %483 = sbr.rel (%p480) target = $region72
      $region71: #{encoder_layer.1} parent=5 // pred_region
        %s484 = ssub.s32 %s29, 1
        %s485 = sand.u32 %s42, 1
        %s486 = scalar_lea.sflag [#allocation3], %s485
        %s487 = sand.u32 %s42, 1
        %s488 = smul.addr %s487, 8
        %s489 = scalar_lea.vmem [#allocation2], %s488
        // Predicated region
        $region73: #{encoder_layer.1} parent=71 // pred_check
          %p490 = pneg %p55
        $region74: #{encoder_layer.1} parent=71 // pred_check_branch
          %492 = sbr.rel (%p490) target = $region76
        $region75: #{encoder_layer.1} parent=71 // pred_region
          %493 = dma.done %s486, 128
        $region76: #{encoder_layer.1} parent=71 // pred_fallthru
          _
        // Predicated region
        $region77: #{encoder_layer.1} parent=71 // pred_check
          %p494 = pneg %p76
        $region78: #{encoder_layer.1} parent=71 // pred_check_branch
          %496 = sbr.rel (%p494) target = $region80
        $region79: #{encoder_layer.1} parent=71 // pred_region
          %497 = dma.done [#allocation6], 1024
        $region80: #{encoder_layer.1} parent=71 // pred_fallthru
          _
        // Predicated region
        $region81: #{encoder_layer.1} parent=71 // pred_check
          %p498 = pneg %p97
        $region82: #{encoder_layer.1} parent=71 // pred_check_branch
          %500 = sbr.rel (%p498) target = $region84
        $region83: #{encoder_layer.1} parent=71 // pred_region
          %501 = dma.done [#allocation6], 64
        $region84: #{encoder_layer.1} parent=71 // pred_fallthru
          _
        // Predicated region
        $region85: #{encoder_layer.1} parent=71 // pred_check
          %p502 = pneg %p118
        $region86: #{encoder_layer.1} parent=71 // pred_check_branch
          %504 = sbr.rel (%p502) target = $region88
        $region87: #{encoder_layer.1} parent=71 // pred_region
          %505 = dma.done [#allocation9], 256
        $region88: #{encoder_layer.1} parent=71 // pred_fallthru
          _
        // Predicated region
        $region89: #{encoder_layer.1} parent=71 // pred_check
          %p506 = pneg %p139
        $region90: #{encoder_layer.1} parent=71 // pred_check_branch
          %508 = sbr.rel (%p506) target = $region92
        $region91: #{encoder_layer.1} parent=71 // pred_region
          %509 = dma.done [#allocation9], 16
        $region92: #{encoder_layer.1} parent=71 // pred_fallthru
          _
        // Predicated region
        $region93: #{encoder_layer.1} parent=71 // pred_check
          %p510 = pneg %p160
        $region94: #{encoder_layer.1} parent=71 // pred_check_branch
          %512 = sbr.rel (%p510) target = $region96
        $region95: #{encoder_layer.1} parent=71 // pred_region
          %513 = dma.done [#allocation12], 16
        $region96: #{encoder_layer.1} parent=71 // pred_fallthru
          _
        // Predicated region
        $region97: #{encoder_layer.1} parent=71 // pred_check
          %p514 = pneg %p181
        $region98: #{encoder_layer.1} parent=71 // pred_check_branch
          %516 = sbr.rel (%p514) target = $region100
        $region99: #{encoder_layer.1} parent=71 // pred_region
          %517 = dma.done [#allocation12], 16
        $region100: #{encoder_layer.1} parent=71 // pred_fallthru
          _
        // Predicated region
        $region101: #{encoder_layer.1} parent=71 // pred_check
          %p518 = pneg %p202
        $region102: #{encoder_layer.1} parent=71 // pred_check_branch
          %520 = sbr.rel (%p518) target = $region104
        $region103: #{encoder_layer.1} parent=71 // pred_region
          %521 = dma.done [#allocation15], 256
        $region104: #{encoder_layer.1} parent=71 // pred_fallthru
          _
        // Predicated region
        $region105: #{encoder_layer.1} parent=71 // pred_check
          %p522 = pneg %p223
        $region106: #{encoder_layer.1} parent=71 // pred_check_branch
          %524 = sbr.rel (%p522) target = $region108
        $region107: #{encoder_layer.1} parent=71 // pred_region
          %525 = dma.done [#allocation15], 16
        $region108: #{encoder_layer.1} parent=71 // pred_fallthru
          _
        %s526 = sand.u32 %s42, 1
        %s527 = scalar_lea.sflag [#allocation3], %s526
        %s528 = sand.u32 %s42, 1
        %s529 = smul.addr %s528, 8
        %s530 = scalar_lea.vmem [#allocation2], %s529
        %p531 = pneg %p55
        %p532 = pneg %p52
        %p533 = pneg %p76
        %p534 = pneg %p73
        %p535 = pneg %p97
        %p536 = pneg %p94
        %p537 = pneg %p118
        %p538 = pneg %p115
        %p539 = pneg %p139
        %p540 = pneg %p136
        %p541 = pneg %p160
        %p542 = pneg %p157
        %p543 = pneg %p181
        %p544 = pneg %p178
        %p545 = pneg %p202
        %p546 = pneg %p199
        %p547 = pneg %p223
        %p548 = pneg %p220
        %p549 = pneg %p244
        %p550 = pneg %p241
        %p551 = pneg %p265
        %p552 = pneg %p262
        %p553 = pneg %p286
        %p554 = pneg %p283
        %p555 = pneg %p307
        %p556 = pneg %p304
        %p557 = pneg %p333
        %p558 = pneg %p330
        %s559 = sand.u32 %s320, 1
        %s560 = scalar_lea.sflag [#allocation4], %s559
        %s561 = sand.u32 %s320, 1
        %s562 = smul.addr %s561, 8
        %s563 = scalar_lea.vmem [#allocation17], %s562
        %v564 = vld [vmem:[%s489] sm:$0xff]
        %v565 = vld [vmem:[#allocation5] sm:$0xff]
        %v566 = vld [vmem:[#allocation5 + $0x8] sm:$0xff]
        %v567 = vld [vmem:[#allocation5 + $0x10] sm:$0xff]
        %v568 = vld [vmem:[#allocation5 + $0x18] sm:$0xff]
        %v569 = vld [vmem:[#allocation5 + $0x20] sm:$0xff]
        %v570 = vld [vmem:[#allocation5 + $0x28] sm:$0xff]
        %v571 = vld [vmem:[#allocation5 + $0x30] sm:$0xff]
        %v572 = vld [vmem:[#allocation5 + $0x38] sm:$0xff]
        %v573 = vld [vmem:[#allocation7] sm:$0x1]
        %v574 = vld [vmem:[#allocation7 + $0x1] sm:$0x1]
        %v575 = vld [vmem:[#allocation7 + $0x2] sm:$0x1]
        %v576 = vld [vmem:[#allocation7 + $0x3] sm:$0x1]
        %v581 = vlaneseq
        %v582 = vshrl.u32 %v581, 7
        %v583 = vsub.s32 0, %v582
        %v584 = vrot.slane %v573, %v583
        %v585 = vlaneseq
        %v586 = vshrl.u32 %v585, 7
        %v587 = vsub.s32 0, %v586
        %v588 = vrot.slane %v574, %v587
        %v589 = vlaneseq
        %v590 = vshrl.u32 %v589, 7
        %v591 = vsub.s32 0, %v590
        %v592 = vrot.slane %v575, %v591
        %v593 = vlaneseq
        %v594 = vshrl.u32 %v593, 7
        %v595 = vsub.s32 0, %v594
        %v596 = vrot.slane %v576, %v595
        %vm601 = vcmask 130048
        %v603 = vsel %vm601, %v564, 0
        %605 = vmatprep.subr.mxu0 0.0
        %606 = vmatpush1.msra.mxu0 %v565
        %607 = vmatprep.subr.mxu0 0.0
        %608 = vmatpush1.msra.mxu0 %v566
        %609 = vmatprep.subr.mxu0 0.0
        %610 = vmatpush1.msra.mxu0 0.0
        %611 = vmatprep.subr.mxu0 0.0
        %612 = vmatpush1.msra.mxu0 0.0
        %613 = vmatprep.subr.mxu0 0.0
        %614 = vmatpush1.msra.mxu0 0.0
        %615 = vmatprep.subr.mxu0 0.0
        %616 = vmatpush1.msra.mxu0 0.0
        %617 = vmatprep.subr.mxu0 0.0
        %618 = vmatpush1.msra.mxu0 0.0
        %619 = vmatprep.subr.mxu0 0.0
        %620 = vmatpush1.msra.mxu0 0.0
        %621 = vmatprep.subr.mxu0 0.0
        %622 = vmatpush1.msra.mxu0 0.0
        %623 = vmatprep.subr.mxu0 0.0
        %624 = vmatpush1.msra.mxu0 0.0
        %625 = vmatprep.subr.mxu0 0.0
        %626 = vmatpush1.msra.mxu0 0.0
        %627 = vmatprep.subr.mxu0 0.0
        %628 = vmatpush1.msra.mxu0 0.0
        %629 = vmatprep.subr.mxu0 0.0
        %630 = vmatpush1.msra.mxu0 0.0
        %631 = vmatprep.subr.mxu0 0.0
        %632 = vmatpush1.msra.mxu0 0.0
        %633 = vmatprep.subr.mxu0 0.0
        %634 = vmatpush1.msra.mxu0 0.0
        %635 = vmatprep.subr.mxu0 0.0
        %636 = vmatpush1.msra.mxu0 0.0
        %637 = vmatprep.subr.mxu0 0.0
        %638 = vmatpush1.msra.mxu0 0.0
        %639 = vmatprep.subr.mxu0 0.0
        %640 = vmatpush1.msra.mxu0 0.0
        %641 = vmatprep.subr.mxu0 0.0
        %642 = vmatpush1.msra.mxu0 0.0
        %643 = vmatprep.subr.mxu0 0.0
        %644 = vmatpush1.msra.mxu0 0.0
        %645 = vmatprep.subr.mxu0 0.0
        %646 = vmatpush1.msra.mxu0 0.0
        %647 = vmatprep.subr.mxu0 0.0
        %648 = vmatpush1.msra.mxu0 0.0
        %649 = vmatprep.subr.mxu0 0.0
        %650 = vmatpush1.msra.mxu0 0.0
        %651 = vmatprep.subr.mxu0 0.0
        %652 = vmatpush1.msra.mxu0 0.0
        %653 = vmatprep.subr.mxu0 0.0
        %654 = vmatpush1.msra.mxu0 0.0
        %655 = vmatprep.subr.mxu0 0.0
        %656 = vmatpush1.msra.mxu0 0.0
        %657 = vmatprep.subr.mxu0 0.0
        %658 = vmatpush1.msra.mxu0 0.0
        %659 = vmatprep.subr.mxu0 0.0
        %660 = vmatpush1.msra.mxu0 0.0
        %661 = vmatprep.subr.mxu0 0.0
        %662 = vmatpush1.msra.mxu0 0.0
        %663 = vmatprep.subr.mxu0 0.0
        %664 = vmatpush1.msra.mxu0 0.0
        %665 = vmatprep.subr.mxu0 0.0
        %666 = vmatpush1.msra.mxu0 0.0
        %667 = vmatprep.subr.mxu0 0.0
        %668 = vmatpush1.msra.mxu0 0.0
        %669 = vmatprep.mubr.f32.mxu0 0.0
        %670 = vmatmul.mubr.f32.gmra.mrb[0].mxu0 %v603
        %v671 = vpop.f32.mrb[0].mxu0
        %v672 = vadd.f32 %v584, %v671
        %v673 = vpop.f32.mrb[0].mxu0
        %674 = vdwg.mxu0
        %675 = vmatprep.subr.mxu0 0.0
        %676 = vmatpush1.msra.mxu0 %v567
        %677 = vmatprep.subr.mxu0 0.0
        %678 = vmatpush1.msra.mxu0 %v568
        %679 = vmatprep.subr.mxu0 0.0
        %680 = vmatpush1.msra.mxu0 0.0
        %681 = vmatprep.subr.mxu0 0.0
        %682 = vmatpush1.msra.mxu0 0.0
        %683 = vmatprep.subr.mxu0 0.0
        %684 = vmatpush1.msra.mxu0 0.0
        %685 = vmatprep.subr.mxu0 0.0
        %686 = vmatpush1.msra.mxu0 0.0
        %687 = vmatprep.subr.mxu0 0.0
        %688 = vmatpush1.msra.mxu0 0.0
        %689 = vmatprep.subr.mxu0 0.0
        %690 = vmatpush1.msra.mxu0 0.0
        %691 = vmatprep.subr.mxu0 0.0
        %692 = vmatpush1.msra.mxu0 0.0
        %693 = vmatprep.subr.mxu0 0.0
        %694 = vmatpush1.msra.mxu0 0.0
        %695 = vmatprep.subr.mxu0 0.0
        %696 = vmatpush1.msra.mxu0 0.0
        %697 = vmatprep.subr.mxu0 0.0
        %698 = vmatpush1.msra.mxu0 0.0
        %699 = vmatprep.subr.mxu0 0.0
        %700 = vmatpush1.msra.mxu0 0.0
        %701 = vmatprep.subr.mxu0 0.0
        %702 = vmatpush1.msra.mxu0 0.0
        %703 = vmatprep.subr.mxu0 0.0
        %704 = vmatpush1.msra.mxu0 0.0
        %705 = vmatprep.subr.mxu0 0.0
        %706 = vmatpush1.msra.mxu0 0.0
        %707 = vmatprep.subr.mxu0 0.0
        %708 = vmatpush1.msra.mxu0 0.0
        %709 = vmatprep.subr.mxu0 0.0
        %710 = vmatpush1.msra.mxu0 0.0
        %711 = vmatprep.subr.mxu0 0.0
        %712 = vmatpush1.msra.mxu0 0.0
        %713 = vmatprep.subr.mxu0 0.0
        %714 = vmatpush1.msra.mxu0 0.0
        %715 = vmatprep.subr.mxu0 0.0
        %716 = vmatpush1.msra.mxu0 0.0
        %717 = vmatprep.subr.mxu0 0.0
        %718 = vmatpush1.msra.mxu0 0.0
        %719 = vmatprep.subr.mxu0 0.0
        %720 = vmatpush1.msra.mxu0 0.0
        %721 = vmatprep.subr.mxu0 0.0
        %722 = vmatpush1.msra.mxu0 0.0
        %723 = vmatprep.subr.mxu0 0.0
        %724 = vmatpush1.msra.mxu0 0.0
        %725 = vmatprep.subr.mxu0 0.0
        %726 = vmatpush1.msra.mxu0 0.0
        %727 = vmatprep.subr.mxu0 0.0
        %728 = vmatpush1.msra.mxu0 0.0
        %729 = vmatprep.subr.mxu0 0.0
        %730 = vmatpush1.msra.mxu0 0.0
        %731 = vmatprep.subr.mxu0 0.0
        %732 = vmatpush1.msra.mxu0 0.0
        %733 = vmatprep.subr.mxu0 0.0
        %734 = vmatpush1.msra.mxu0 0.0
        %735 = vmatprep.subr.mxu0 0.0
        %736 = vmatpush1.msra.mxu0 0.0
        %737 = vmatprep.subr.mxu0 0.0
        %738 = vmatpush1.msra.mxu0 0.0
        %739 = vmatprep.mubr.f32.mxu0 0.0
        %740 = vmatmul.mubr.f32.gmra.mrb[0].mxu0 %v603
        %v741 = vpop.f32.mrb[0].mxu0
        %v742 = vadd.f32 %v588, %v741
        %v743 = vpop.f32.mrb[0].mxu0
        %744 = vdwg.mxu0
        %745 = vmatprep.subr.mxu0 0.0
        %746 = vmatpush1.msra.mxu0 %v569
        %747 = vmatprep.subr.mxu0 0.0
        %748 = vmatpush1.msra.mxu0 %v570
        %749 = vmatprep.subr.mxu0 0.0
        %750 = vmatpush1.msra.mxu0 0.0
        %751 = vmatprep.subr.mxu0 0.0
        %752 = vmatpush1.msra.mxu0 0.0
        %753 = vmatprep.subr.mxu0 0.0
        %754 = vmatpush1.msra.mxu0 0.0
        %755 = vmatprep.subr.mxu0 0.0
        %756 = vmatpush1.msra.mxu0 0.0
        %757 = vmatprep.subr.mxu0 0.0
        %758 = vmatpush1.msra.mxu0 0.0
        %759 = vmatprep.subr.mxu0 0.0
        %760 = vmatpush1.msra.mxu0 0.0
        %761 = vmatprep.subr.mxu0 0.0
        %762 = vmatpush1.msra.mxu0 0.0
        %763 = vmatprep.subr.mxu0 0.0
        %764 = vmatpush1.msra.mxu0 0.0
        %765 = vmatprep.subr.mxu0 0.0
        %766 = vmatpush1.msra.mxu0 0.0
        %767 = vmatprep.subr.mxu0 0.0
        %768 = vmatpush1.msra.mxu0 0.0
        %769 = vmatprep.subr.mxu0 0.0
        %770 = vmatpush1.msra.mxu0 0.0
        %771 = vmatprep.subr.mxu0 0.0
        %772 = vmatpush1.msra.mxu0 0.0
        %773 = vmatprep.subr.mxu0 0.0
        %774 = vmatpush1.msra.mxu0 0.0
        %775 = vmatprep.subr.mxu0 0.0
        %776 = vmatpush1.msra.mxu0 0.0
        %777 = vmatprep.subr.mxu0 0.0
        %778 = vmatpush1.msra.mxu0 0.0
        %779 = vmatprep.subr.mxu0 0.0
        %780 = vmatpush1.msra.mxu0 0.0
        %781 = vmatprep.subr.mxu0 0.0
        %782 = vmatpush1.msra.mxu0 0.0
        %783 = vmatprep.subr.mxu0 0.0
        %784 = vmatpush1.msra.mxu0 0.0
        %785 = vmatprep.subr.mxu0 0.0
        %786 = vmatpush1.msra.mxu0 0.0
        %787 = vmatprep.subr.mxu0 0.0
        %788 = vmatpush1.msra.mxu0 0.0
        %789 = vmatprep.subr.mxu0 0.0
        %790 = vmatpush1.msra.mxu0 0.0
        %791 = vmatprep.subr.mxu0 0.0
        %792 = vmatpush1.msra.mxu0 0.0
        %793 = vmatprep.subr.mxu0 0.0
        %794 = vmatpush1.msra.mxu0 0.0
        %795 = vmatprep.subr.mxu0 0.0
        %796 = vmatpush1.msra.mxu0 0.0
        %797 = vmatprep.subr.mxu0 0.0
        %798 = vmatpush1.msra.mxu0 0.0
        %799 = vmatprep.subr.mxu0 0.0
        %800 = vmatpush1.msra.mxu0 0.0
        %801 = vmatprep.subr.mxu0 0.0
        %802 = vmatpush1.msra.mxu0 0.0
        %803 = vmatprep.subr.mxu0 0.0
        %804 = vmatpush1.msra.mxu0 0.0
        %805 = vmatprep.subr.mxu0 0.0
        %806 = vmatpush1.msra.mxu0 0.0
        %807 = vmatprep.subr.mxu0 0.0
        %808 = vmatpush1.msra.mxu0 0.0
        %809 = vmatprep.mubr.f32.mxu0 0.0
        %810 = vmatmul.mubr.f32.gmra.mrb[0].mxu0 %v603
        %v811 = vpop.f32.mrb[0].mxu0
        %v812 = vadd.f32 %v592, %v811
        %v813 = vpop.f32.mrb[0].mxu0
        %814 = vdwg.mxu0
        %815 = vmatprep.subr.mxu0 0.0
        %816 = vmatpush1.msra.mxu0 %v571
        %817 = vmatprep.subr.mxu0 0.0
        %818 = vmatpush1.msra.mxu0 %v572
        %819 = vmatprep.subr.mxu0 0.0
        %820 = vmatpush1.msra.mxu0 0.0
        %821 = vmatprep.subr.mxu0 0.0
        %822 = vmatpush1.msra.mxu0 0.0
        %823 = vmatprep.subr.mxu0 0.0
        %824 = vmatpush1.msra.mxu0 0.0
        %825 = vmatprep.subr.mxu0 0.0
        %826 = vmatpush1.msra.mxu0 0.0
        %827 = vmatprep.subr.mxu0 0.0
        %828 = vmatpush1.msra.mxu0 0.0
        %829 = vmatprep.subr.mxu0 0.0
        %830 = vmatpush1.msra.mxu0 0.0
        %831 = vmatprep.subr.mxu0 0.0
        %832 = vmatpush1.msra.mxu0 0.0
        %833 = vmatprep.subr.mxu0 0.0
        %834 = vmatpush1.msra.mxu0 0.0
        %835 = vmatprep.subr.mxu0 0.0
        %836 = vmatpush1.msra.mxu0 0.0
        %837 = vmatprep.subr.mxu0 0.0
        %838 = vmatpush1.msra.mxu0 0.0
        %839 = vmatprep.subr.mxu0 0.0
        %840 = vmatpush1.msra.mxu0 0.0
        %841 = vmatprep.subr.mxu0 0.0
        %842 = vmatpush1.msra.mxu0 0.0
        %843 = vmatprep.subr.mxu0 0.0
        %844 = vmatpush1.msra.mxu0 0.0
        %845 = vmatprep.subr.mxu0 0.0
        %846 = vmatpush1.msra.mxu0 0.0
        %847 = vmatprep.subr.mxu0 0.0
        %848 = vmatpush1.msra.mxu0 0.0
        %849 = vmatprep.subr.mxu0 0.0
        %850 = vmatpush1.msra.mxu0 0.0
        %851 = vmatprep.subr.mxu0 0.0
        %852 = vmatpush1.msra.mxu0 0.0
        %853 = vmatprep.subr.mxu0 0.0
        %854 = vmatpush1.msra.mxu0 0.0
        %855 = vmatprep.subr.mxu0 0.0
        %856 = vmatpush1.msra.mxu0 0.0
        %857 = vmatprep.subr.mxu0 0.0
        %858 = vmatpush1.msra.mxu0 0.0
        %859 = vmatprep.subr.mxu0 0.0
        %860 = vmatpush1.msra.mxu0 0.0
        %861 = vmatprep.subr.mxu0 0.0
        %862 = vmatpush1.msra.mxu0 0.0
        %863 = vmatprep.subr.mxu0 0.0
        %864 = vmatpush1.msra.mxu0 0.0
        %865 = vmatprep.subr.mxu0 0.0
        %866 = vmatpush1.msra.mxu0 0.0
        %867 = vmatprep.subr.mxu0 0.0
        %868 = vmatpush1.msra.mxu0 0.0
        %869 = vmatprep.subr.mxu0 0.0
        %870 = vmatpush1.msra.mxu0 0.0
        %871 = vmatprep.subr.mxu0 0.0
        %872 = vmatpush1.msra.mxu0 0.0
        %873 = vmatprep.subr.mxu0 0.0
        %874 = vmatpush1.msra.mxu0 0.0
        %875 = vmatprep.subr.mxu0 0.0
        %876 = vmatpush1.msra.mxu0 0.0
        %877 = vmatprep.subr.mxu0 0.0
        %878 = vmatpush1.msra.mxu0 0.0
        %879 = vmatprep.mubr.f32.mxu0 0.0
        %880 = vmatmul.mubr.f32.gmra.mrb[0].mxu0 %v603
        %v881 = vpop.f32.mrb[0].mxu0
        %v882 = vadd.f32 %v596, %v881
        %v883 = vpop.f32.mrb[0].mxu0
        %884 = vdwg.mxu0
        %886 = vrot.lane.b32.xlu0 %v672, 124
        %v887 = vpop.permute.xlu0 %886
        %vm888 = vcmask 31744
        %v889 = vsel %vm888, %v672, 0
        %v891 = vsel %vm888, %v887, 0
        %893 = vmatprep.subr.mxu0 0.0
        %894 = vmatpush1.xpose.msra.mxu0 %v891
        %895 = vmatprep.subr.mxu0 0.0
        %896 = vmatpush1.xpose.msra.mxu0 0.0
        %897 = vmatprep.subr.mxu0 0.0
        %898 = vmatpush1.xpose.msra.mxu0 0.0
        %899 = vmatprep.subr.mxu0 0.0
        %900 = vmatpush1.xpose.msra.mxu0 0.0
        %901 = vmatprep.subr.mxu0 0.0
        %902 = vmatpush1.xpose.msra.mxu0 0.0
        %903 = vmatprep.subr.mxu0 0.0
        %904 = vmatpush1.xpose.msra.mxu0 0.0
        %905 = vmatprep.subr.mxu0 0.0
        %906 = vmatpush1.xpose.msra.mxu0 0.0
        %907 = vmatprep.subr.mxu0 0.0
        %908 = vmatpush1.xpose.msra.mxu0 0.0
        %909 = vmatprep.subr.mxu0 0.0
        %910 = vmatpush1.xpose.msra.mxu0 0.0
        %911 = vmatprep.subr.mxu0 0.0
        %912 = vmatpush1.xpose.msra.mxu0 0.0
        %913 = vmatprep.subr.mxu0 0.0
        %914 = vmatpush1.xpose.msra.mxu0 0.0
        %915 = vmatprep.subr.mxu0 0.0
        %916 = vmatpush1.xpose.msra.mxu0 0.0
        %917 = vmatprep.subr.mxu0 0.0
        %918 = vmatpush1.xpose.msra.mxu0 0.0
        %919 = vmatprep.subr.mxu0 0.0
        %920 = vmatpush1.xpose.msra.mxu0 0.0
        %921 = vmatprep.subr.mxu0 0.0
        %922 = vmatpush1.xpose.msra.mxu0 0.0
        %923 = vmatprep.subr.mxu0 0.0
        %924 = vmatpush1.xpose.msra.mxu0 0.0
        %925 = vmatprep.subr.mxu0 0.0
        %926 = vmatpush1.xpose.msra.mxu0 0.0
        %927 = vmatprep.subr.mxu0 0.0
        %928 = vmatpush1.xpose.msra.mxu0 0.0
        %929 = vmatprep.subr.mxu0 0.0
        %930 = vmatpush1.xpose.msra.mxu0 0.0
        %931 = vmatprep.subr.mxu0 0.0
        %932 = vmatpush1.xpose.msra.mxu0 0.0
        %933 = vmatprep.subr.mxu0 0.0
        %934 = vmatpush1.xpose.msra.mxu0 0.0
        %935 = vmatprep.subr.mxu0 0.0
        %936 = vmatpush1.xpose.msra.mxu0 0.0
        %937 = vmatprep.subr.mxu0 0.0
        %938 = vmatpush1.xpose.msra.mxu0 0.0
        %939 = vmatprep.subr.mxu0 0.0
        %940 = vmatpush1.xpose.msra.mxu0 0.0
        %941 = vmatprep.subr.mxu0 0.0
        %942 = vmatpush1.xpose.msra.mxu0 0.0
        %943 = vmatprep.subr.mxu0 0.0
        %944 = vmatpush1.xpose.msra.mxu0 0.0
        %945 = vmatprep.subr.mxu0 0.0
        %946 = vmatpush1.xpose.msra.mxu0 0.0
        %947 = vmatprep.subr.mxu0 0.0
        %948 = vmatpush1.xpose.msra.mxu0 0.0
        %949 = vmatprep.subr.mxu0 0.0
        %950 = vmatpush1.xpose.msra.mxu0 0.0
        %951 = vmatprep.subr.mxu0 0.0
        %952 = vmatpush1.xpose.msra.mxu0 0.0
        %953 = vmatprep.subr.mxu0 0.0
        %954 = vmatpush1.xpose.msra.mxu0 0.0
        %955 = vmatprep.subr.mxu0 0.0
        %956 = vmatpush1.xpose.msra.mxu0 0.0
        %957 = vmatprep.mubr.f32.mxu0 0.0
        %958 = vmatmul.mubr.f32.gmra.mrb[0].mxu0 %v889
        %v959 = vpop.f32.mrb[0].mxu0
        %v960 = vadd.f32 0.0, %v959
        %v961 = vpop.f32.mrb[0].mxu0
        %962 = vdwg.mxu0
        %964 = vrot.lane.b32.xlu0 %v742, 124
        %v965 = vpop.permute.xlu0 %964
        %v966 = vsel %vm888, %v742, 0
        %v968 = vsel %vm888, %v965, 0
        %970 = vmatprep.subr.mxu0 0.0
        %971 = vmatpush1.xpose.msra.mxu0 %v968
        %972 = vmatprep.subr.mxu0 0.0
        %973 = vmatpush1.xpose.msra.mxu0 0.0
        %974 = vmatprep.subr.mxu0 0.0
        %975 = vmatpush1.xpose.msra.mxu0 0.0
        %976 = vmatprep.subr.mxu0 0.0
        %977 = vmatpush1.xpose.msra.mxu0 0.0
        %978 = vmatprep.subr.mxu0 0.0
        %979 = vmatpush1.xpose.msra.mxu0 0.0
        %980 = vmatprep.subr.mxu0 0.0
        %981 = vmatpush1.xpose.msra.mxu0 0.0
        %982 = vmatprep.subr.mxu0 0.0
        %983 = vmatpush1.xpose.msra.mxu0 0.0
        %984 = vmatprep.subr.mxu0 0.0
        %985 = vmatpush1.xpose.msra.mxu0 0.0
        %986 = vmatprep.subr.mxu0 0.0
        %987 = vmatpush1.xpose.msra.mxu0 0.0
        %988 = vmatprep.subr.mxu0 0.0
        %989 = vmatpush1.xpose.msra.mxu0 0.0
        %990 = vmatprep.subr.mxu0 0.0
        %991 = vmatpush1.xpose.msra.mxu0 0.0
        %992 = vmatprep.subr.mxu0 0.0
        %993 = vmatpush1.xpose.msra.mxu0 0.0
        %994 = vmatprep.subr.mxu0 0.0
        %995 = vmatpush1.xpose.msra.mxu0 0.0
        %996 = vmatprep.subr.mxu0 0.0
        %997 = vmatpush1.xpose.msra.mxu0 0.0
        %998 = vmatprep.subr.mxu0 0.0
        %999 = vmatpush1.xpose.msra.mxu0 0.0
        %1000 = vmatprep.subr.mxu0 0.0
        %1001 = vmatpush1.xpose.msra.mxu0 0.0
        %1002 = vmatprep.subr.mxu0 0.0
        %1003 = vmatpush1.xpose.msra.mxu0 0.0
        %1004 = vmatprep.subr.mxu0 0.0
        %1005 = vmatpush1.xpose.msra.mxu0 0.0
        %1006 = vmatprep.subr.mxu0 0.0
        %1007 = vmatpush1.xpose.msra.mxu0 0.0
        %1008 = vmatprep.subr.mxu0 0.0
        %1009 = vmatpush1.xpose.msra.mxu0 0.0
        %1010 = vmatprep.subr.mxu0 0.0
        %1011 = vmatpush1.xpose.msra.mxu0 0.0
        %1012 = vmatprep.subr.mxu0 0.0
        %1013 = vmatpush1.xpose.msra.mxu0 0.0
        %1014 = vmatprep.subr.mxu0 0.0
        %1015 = vmatpush1.xpose.msra.mxu0 0.0
        %1016 = vmatprep.subr.mxu0 0.0
        %1017 = vmatpush1.xpose.msra.mxu0 0.0
        %1018 = vmatprep.subr.mxu0 0.0
        %1019 = vmatpush1.xpose.msra.mxu0 0.0
        %1020 = vmatprep.subr.mxu0 0.0
        %1021 = vmatpush1.xpose.msra.mxu0 0.0
        %1022 = vmatprep.subr.mxu0 0.0
        %1023 = vmatpush1.xpose.msra.mxu0 0.0
        %1024 = vmatprep.subr.mxu0 0.0
        %1025 = vmatpush1.xpose.msra.mxu0 0.0
        %1026 = vmatprep.subr.mxu0 0.0
        %1027 = vmatpush1.xpose.msra.mxu0 0.0
        %1028 = vmatprep.subr.mxu0 0.0
        %1029 = vmatpush1.xpose.msra.mxu0 0.0
        %1030 = vmatprep.subr.mxu0 0.0
        %1031 = vmatpush1.xpose.msra.mxu0 0.0
        %1032 = vmatprep.subr.mxu0 0.0
        %1033 = vmatpush1.xpose.msra.mxu0 0.0
        %1034 = vmatprep.mubr.f32.mxu0 0.0
        %1035 = vmatmul.mubr.f32.gmra.mrb[0].mxu0 %v966
        %v1036 = vpop.f32.mrb[0].mxu0
        %v1037 = vadd.f32 0.0, %v1036
        %v1038 = vpop.f32.mrb[0].mxu0
        %1039 = vdwg.mxu0
        %1041 = vrot.lane.b32.xlu0 %v812, 124
        %v1042 = vpop.permute.xlu0 %1041
        %v1043 = vsel %vm888, %v812, 0
        %v1045 = vsel %vm888, %v1042, 0
        %1047 = vmatprep.subr.mxu0 0.0
        %1048 = vmatpush1.xpose.msra.mxu0 %v1045
        %1049 = vmatprep.subr.mxu0 0.0
        %1050 = vmatpush1.xpose.msra.mxu0 0.0
        %1051 = vmatprep.subr.mxu0 0.0
        %1052 = vmatpush1.xpose.msra.mxu0 0.0
        %1053 = vmatprep.subr.mxu0 0.0
        %1054 = vmatpush1.xpose.msra.mxu0 0.0
        %1055 = vmatprep.subr.mxu0 0.0
        %1056 = vmatpush1.xpose.msra.mxu0 0.0
        %1057 = vmatprep.subr.mxu0 0.0
        %1058 = vmatpush1.xpose.msra.mxu0 0.0
        %1059 = vmatprep.subr.mxu0 0.0
        %1060 = vmatpush1.xpose.msra.mxu0 0.0
        %1061 = vmatprep.subr.mxu0 0.0
        %1062 = vmatpush1.xpose.msra.mxu0 0.0
        %1063 = vmatprep.subr.mxu0 0.0
        %1064 = vmatpush1.xpose.msra.mxu0 0.0
        %1065 = vmatprep.subr.mxu0 0.0
        %1066 = vmatpush1.xpose.msra.mxu0 0.0
        %1067 = vmatprep.subr.mxu0 0.0
        %1068 = vmatpush1.xpose.msra.mxu0 0.0
        %1069 = vmatprep.subr.mxu0 0.0
        %1070 = vmatpush1.xpose.msra.mxu0 0.0
        %1071 = vmatprep.subr.mxu0 0.0
        %1072 = vmatpush1.xpose.msra.mxu0 0.0
        %1073 = vmatprep.subr.mxu0 0.0
        %1074 = vmatpush1.xpose.msra.mxu0 0.0
        %1075 = vmatprep.subr.mxu0 0.0
        %1076 = vmatpush1.xpose.msra.mxu0 0.0
        %1077 = vmatprep.subr.mxu0 0.0
        %1078 = vmatpush1.xpose.msra.mxu0 0.0
        %1079 = vmatprep.subr.mxu0 0.0
        %1080 = vmatpush1.xpose.msra.mxu0 0.0
        %1081 = vmatprep.subr.mxu0 0.0
        %1082 = vmatpush1.xpose.msra.mxu0 0.0
        %1083 = vmatprep.subr.mxu0 0.0
        %1084 = vmatpush1.xpose.msra.mxu0 0.0
        %1085 = vmatprep.subr.mxu0 0.0
        %1086 = vmatpush1.xpose.msra.mxu0 0.0
        %1087 = vmatprep.subr.mxu0 0.0
        %1088 = vmatpush1.xpose.msra.mxu0 0.0
        %1089 = vmatprep.subr.mxu0 0.0
        %1090 = vmatpush1.xpose.msra.mxu0 0.0
        %1091 = vmatprep.subr.mxu0 0.0
        %1092 = vmatpush1.xpose.msra.mxu0 0.0
        %1093 = vmatprep.subr.mxu0 0.0
        %1094 = vmatpush1.xpose.msra.mxu0 0.0
        %1095 = vmatprep.subr.mxu0 0.0
        %1096 = vmatpush1.xpose.msra.mxu0 0.0
        %1097 = vmatprep.subr.mxu0 0.0
        %1098 = vmatpush1.xpose.msra.mxu0 0.0
        %1099 = vmatprep.subr.mxu0 0.0
        %1100 = vmatpush1.xpose.msra.mxu0 0.0
        %1101 = vmatprep.subr.mxu0 0.0
        %1102 = vmatpush1.xpose.msra.mxu0 0.0
        %1103 = vmatprep.subr.mxu0 0.0
        %1104 = vmatpush1.xpose.msra.mxu0 0.0
        %1105 = vmatprep.subr.mxu0 0.0
        %1106 = vmatpush1.xpose.msra.mxu0 0.0
        %1107 = vmatprep.subr.mxu0 0.0
        %1108 = vmatpush1.xpose.msra.mxu0 0.0
        %1109 = vmatprep.subr.mxu0 0.0
        %1110 = vmatpush1.xpose.msra.mxu0 0.0
        %1111 = vmatprep.mubr.f32.mxu0 0.0
        %1112 = vmatmul.mubr.f32.gmra.mrb[0].mxu0 %v1043
        %v1113 = vpop.f32.mrb[0].mxu0
        %v1114 = vadd.f32 0.0, %v1113
        %v1115 = vpop.f32.mrb[0].mxu0
        %1116 = vdwg.mxu0
        %1118 = vrot.lane.b32.xlu0 %v882, 124
        %v1119 = vpop.permute.xlu0 %1118
        %v1120 = vsel %vm888, %v882, 0
        %v1122 = vsel %vm888, %v1119, 0
        %1124 = vmatprep.subr.mxu0 0.0
        %1125 = vmatpush1.xpose.msra.mxu0 %v1122
        %1126 = vmatprep.subr.mxu0 0.0
        %1127 = vmatpush1.xpose.msra.mxu0 0.0
        %1128 = vmatprep.subr.mxu0 0.0
        %1129 = vmatpush1.xpose.msra.mxu0 0.0
        %1130 = vmatprep.subr.mxu0 0.0
        %1131 = vmatpush1.xpose.msra.mxu0 0.0
        %1132 = vmatprep.subr.mxu0 0.0
        %1133 = vmatpush1.xpose.msra.mxu0 0.0
        %1134 = vmatprep.subr.mxu0 0.0
        %1135 = vmatpush1.xpose.msra.mxu0 0.0
        %1136 = vmatprep.subr.mxu0 0.0
        %1137 = vmatpush1.xpose.msra.mxu0 0.0
        %1138 = vmatprep.subr.mxu0 0.0
        %1139 = vmatpush1.xpose.msra.mxu0 0.0
        %1140 = vmatprep.subr.mxu0 0.0
        %1141 = vmatpush1.xpose.msra.mxu0 0.0
        %1142 = vmatprep.subr.mxu0 0.0
        %1143 = vmatpush1.xpose.msra.mxu0 0.0
        %1144 = vmatprep.subr.mxu0 0.0
        %1145 = vmatpush1.xpose.msra.mxu0 0.0
        %1146 = vmatprep.subr.mxu0 0.0
        %1147 = vmatpush1.xpose.msra.mxu0 0.0
        %1148 = vmatprep.subr.mxu0 0.0
        %1149 = vmatpush1.xpose.msra.mxu0 0.0
        %1150 = vmatprep.subr.mxu0 0.0
        %1151 = vmatpush1.xpose.msra.mxu0 0.0
        %1152 = vmatprep.subr.mxu0 0.0
        %1153 = vmatpush1.xpose.msra.mxu0 0.0
        %1154 = vmatprep.subr.mxu0 0.0
        %1155 = vmatpush1.xpose.msra.mxu0 0.0
        %1156 = vmatprep.subr.mxu0 0.0
        %1157 = vmatpush1.xpose.msra.mxu0 0.0
        %1158 = vmatprep.subr.mxu0 0.0
        %1159 = vmatpush1.xpose.msra.mxu0 0.0
        %1160 = vmatprep.subr.mxu0 0.0
        %1161 = vmatpush1.xpose.msra.mxu0 0.0
        %1162 = vmatprep.subr.mxu0 0.0
        %1163 = vmatpush1.xpose.msra.mxu0 0.0
        %1164 = vmatprep.subr.mxu0 0.0
        %1165 = vmatpush1.xpose.msra.mxu0 0.0
        %1166 = vmatprep.subr.mxu0 0.0
        %1167 = vmatpush1.xpose.msra.mxu0 0.0
        %1168 = vmatprep.subr.mxu0 0.0
        %1169 = vmatpush1.xpose.msra.mxu0 0.0
        %1170 = vmatprep.subr.mxu0 0.0
        %1171 = vmatpush1.xpose.msra.mxu0 0.0
        %1172 = vmatprep.subr.mxu0 0.0
        %1173 = vmatpush1.xpose.msra.mxu0 0.0
        %1174 = vmatprep.subr.mxu0 0.0
        %1175 = vmatpush1.xpose.msra.mxu0 0.0
        %1176 = vmatprep.subr.mxu0 0.0
        %1177 = vmatpush1.xpose.msra.mxu0 0.0
        %1178 = vmatprep.subr.mxu0 0.0
        %1179 = vmatpush1.xpose.msra.mxu0 0.0
        %1180 = vmatprep.subr.mxu0 0.0
        %1181 = vmatpush1.xpose.msra.mxu0 0.0
        %1182 = vmatprep.subr.mxu0 0.0
        %1183 = vmatpush1.xpose.msra.mxu0 0.0
        %1184 = vmatprep.subr.mxu0 0.0
        %1185 = vmatpush1.xpose.msra.mxu0 0.0
        %1186 = vmatprep.subr.mxu0 0.0
        %1187 = vmatpush1.xpose.msra.mxu0 0.0
        %1188 = vmatprep.mubr.f32.mxu0 0.0
        %1189 = vmatmul.mubr.f32.gmra.mrb[0].mxu0 %v1120
        %v1190 = vpop.f32.mrb[0].mxu0
        %v1191 = vadd.f32 0.0, %v1190
        %v1192 = vpop.f32.mrb[0].mxu0
        %1193 = vdwg.mxu0
        %vm1194 = vcmask 64512
        %v1195 = vsel %vm1194, %v960, -inf
        %1196 = vmax.xlane.f32.xlu0 %v1195
        %v1197 = vpop.xlane.xlu0 %1196
        %v1198 = vsel %vm1194, %v1037, -inf
        %1199 = vmax.xlane.f32.xlu0 %v1198
        %v1200 = vpop.xlane.xlu0 %1199
        %v1201 = vsel %vm1194, %v1114, -inf
        %1202 = vmax.xlane.f32.xlu0 %v1201
        %v1203 = vpop.xlane.xlu0 %1202
        %v1204 = vsel %vm1194, %v1191, -inf
        %1205 = vmax.xlane.f32.xlu0 %v1204
        %v1206 = vpop.xlane.xlu0 %1205
        %v1207 = vsub.f32 %v960, %v1197
        %v1208 = vsub.f32 %v1037, %v1200
        %v1209 = vsub.f32 %v1114, %v1203
        %v1210 = vsub.f32 %v1191, %v1206
        %v1211 = vmul.f32 %v1207, 1.442695
        %v1212 = vpow.pop %v1211
        %v1213 = vmul.f32 %v1208, 1.442695
        %v1214 = vpow.pop %v1213
        %v1215 = vmul.f32 %v1209, 1.442695
        %v1216 = vpow.pop %v1215
        %v1217 = vmul.f32 %v1210, 1.442695
        %v1218 = vpow.pop %v1217
        %v1219 = vsel %vm1194, %v1212, 0.0
        %1220 = vadd.xlane.f32.xlu0 %v1219
        %v1221 = vpop.xlane.xlu0 %1220
        %v1222 = vsel %vm1194, %v1214, 0.0
        %1223 = vadd.xlane.f32.xlu0 %v1222
        %v1224 = vpop.xlane.xlu0 %1223
        %v1225 = vsel %vm1194, %v1216, 0.0
        %1226 = vadd.xlane.f32.xlu0 %v1225
        %v1227 = vpop.xlane.xlu0 %1226
        %v1228 = vsel %vm1194, %v1218, 0.0
        %1229 = vadd.xlane.f32.xlu0 %v1228
        %v1230 = vpop.xlane.xlu0 %1229
        %v1231 = vrcp.pop %v1221
        %v1232 = vrcp.pop %v1224
        %v1233 = vrcp.pop %v1227
        %v1234 = vrcp.pop %v1230
        %v1235 = vmul.f32 %v1212, %v1231
        %v1236 = vmul.f32 %v1214, %v1232
        %v1237 = vmul.f32 %v1216, %v1233
        %v1238 = vmul.f32 %v1218, %v1234
        %1239 = vrot.lane.b32.xlu0 %v672, 120
        %v1240 = vpop.permute.xlu0 %1239
        %v1243 = vsel %vm1194, %v1235, 0
        %1245 = vmatprep.subr.mxu0 0.0
        %1246 = vmatpush1.msra.mxu0 %v1240
        %1247 = vmatprep.subr.mxu0 0.0
        %1248 = vmatpush1.msra.mxu0 0.0
        %1249 = vmatprep.subr.mxu0 0.0
        %1250 = vmatpush1.msra.mxu0 0.0
        %1251 = vmatprep.subr.mxu0 0.0
        %1252 = vmatpush1.msra.mxu0 0.0
        %1253 = vmatprep.subr.mxu0 0.0
        %1254 = vmatpush1.msra.mxu0 0.0
        %1255 = vmatprep.subr.mxu0 0.0
        %1256 = vmatpush1.msra.mxu0 0.0
        %1257 = vmatprep.subr.mxu0 0.0
        %1258 = vmatpush1.msra.mxu0 0.0
        %1259 = vmatprep.subr.mxu0 0.0
        %1260 = vmatpush1.msra.mxu0 0.0
        %1261 = vmatprep.subr.mxu0 0.0
        %1262 = vmatpush1.msra.mxu0 0.0
        %1263 = vmatprep.subr.mxu0 0.0
        %1264 = vmatpush1.msra.mxu0 0.0
        %1265 = vmatprep.subr.mxu0 0.0
        %1266 = vmatpush1.msra.mxu0 0.0
        %1267 = vmatprep.subr.mxu0 0.0
        %1268 = vmatpush1.msra.mxu0 0.0
        %1269 = vmatprep.subr.mxu0 0.0
        %1270 = vmatpush1.msra.mxu0 0.0
        %1271 = vmatprep.subr.mxu0 0.0
        %1272 = vmatpush1.msra.mxu0 0.0
        %1273 = vmatprep.subr.mxu0 0.0
        %1274 = vmatpush1.msra.mxu0 0.0
        %1275 = vmatprep.subr.mxu0 0.0
        %1276 = vmatpush1.msra.mxu0 0.0
        %1277 = vmatprep.subr.mxu0 0.0
        %1278 = vmatpush1.msra.mxu0 0.0
        %1279 = vmatprep.subr.mxu0 0.0
        %1280 = vmatpush1.msra.mxu0 0.0
        %1281 = vmatprep.subr.mxu0 0.0
        %1282 = vmatpush1.msra.mxu0 0.0
        %1283 = vmatprep.subr.mxu0 0.0
        %1284 = vmatpush1.msra.mxu0 0.0
        %1285 = vmatprep.subr.mxu0 0.0
        %1286 = vmatpush1.msra.mxu0 0.0
        %1287 = vmatprep.subr.mxu0 0.0
        %1288 = vmatpush1.msra.mxu0 0.0
        %1289 = vmatprep.subr.mxu0 0.0
        %1290 = vmatpush1.msra.mxu0 0.0
        %1291 = vmatprep.subr.mxu0 0.0
        %1292 = vmatpush1.msra.mxu0 0.0
        %1293 = vmatprep.subr.mxu0 0.0
        %1294 = vmatpush1.msra.mxu0 0.0
        %1295 = vmatprep.subr.mxu0 0.0
        %1296 = vmatpush1.msra.mxu0 0.0
        %1297 = vmatprep.subr.mxu0 0.0
        %1298 = vmatpush1.msra.mxu0 0.0
        %1299 = vmatprep.subr.mxu0 0.0
        %1300 = vmatpush1.msra.mxu0 0.0
        %1301 = vmatprep.subr.mxu0 0.0
        %1302 = vmatpush1.msra.mxu0 0.0
        %1303 = vmatprep.subr.mxu0 0.0
        %1304 = vmatpush1.msra.mxu0 0.0
        %1305 = vmatprep.subr.mxu0 0.0
        %1306 = vmatpush1.msra.mxu0 0.0
        %1307 = vmatprep.subr.mxu0 0.0
        %1308 = vmatpush1.msra.mxu0 0.0
        %1309 = vmatprep.mubr.f32.mxu0 0.0
        %1310 = vmatmul.mubr.f32.gmra.mrb[0].mxu0 %v1243
        %v1311 = vpop.f32.mrb[0].mxu0
        %v1312 = vadd.f32 0.0, %v1311
        %v1313 = vpop.f32.mrb[0].mxu0
        %1314 = vdwg.mxu0
        %1315 = vrot.lane.b32.xlu0 %v742, 120
        %v1316 = vpop.permute.xlu0 %1315
        %v1319 = vsel %vm1194, %v1236, 0
        %1321 = vmatprep.subr.mxu0 0.0
        %1322 = vmatpush1.msra.mxu0 %v1316
        %1323 = vmatprep.subr.mxu0 0.0
        %1324 = vmatpush1.msra.mxu0 0.0
        %1325 = vmatprep.subr.mxu0 0.0
        %1326 = vmatpush1.msra.mxu0 0.0
        %1327 = vmatprep.subr.mxu0 0.0
        %1328 = vmatpush1.msra.mxu0 0.0
        %1329 = vmatprep.subr.mxu0 0.0
        %1330 = vmatpush1.msra.mxu0 0.0
        %1331 = vmatprep.subr.mxu0 0.0
        %1332 = vmatpush1.msra.mxu0 0.0
        %1333 = vmatprep.subr.mxu0 0.0
        %1334 = vmatpush1.msra.mxu0 0.0
        %1335 = vmatprep.subr.mxu0 0.0
        %1336 = vmatpush1.msra.mxu0 0.0
        %1337 = vmatprep.subr.mxu0 0.0
        %1338 = vmatpush1.msra.mxu0 0.0
        %1339 = vmatprep.subr.mxu0 0.0
        %1340 = vmatpush1.msra.mxu0 0.0
        %1341 = vmatprep.subr.mxu0 0.0
        %1342 = vmatpush1.msra.mxu0 0.0
        %1343 = vmatprep.subr.mxu0 0.0
        %1344 = vmatpush1.msra.mxu0 0.0
        %1345 = vmatprep.subr.mxu0 0.0
        %1346 = vmatpush1.msra.mxu0 0.0
        %1347 = vmatprep.subr.mxu0 0.0
        %1348 = vmatpush1.msra.mxu0 0.0
        %1349 = vmatprep.subr.mxu0 0.0
        %1350 = vmatpush1.msra.mxu0 0.0
        %1351 = vmatprep.subr.mxu0 0.0
        %1352 = vmatpush1.msra.mxu0 0.0
        %1353 = vmatprep.subr.mxu0 0.0
        %1354 = vmatpush1.msra.mxu0 0.0
        %1355 = vmatprep.subr.mxu0 0.0
        %1356 = vmatpush1.msra.mxu0 0.0
        %1357 = vmatprep.subr.mxu0 0.0
        %1358 = vmatpush1.msra.mxu0 0.0
        %1359 = vmatprep.subr.mxu0 0.0
        %1360 = vmatpush1.msra.mxu0 0.0
        %1361 = vmatprep.subr.mxu0 0.0
        %1362 = vmatpush1.msra.mxu0 0.0
        %1363 = vmatprep.subr.mxu0 0.0
        %1364 = vmatpush1.msra.mxu0 0.0
        %1365 = vmatprep.subr.mxu0 0.0
        %1366 = vmatpush1.msra.mxu0 0.0
        %1367 = vmatprep.subr.mxu0 0.0
        %1368 = vmatpush1.msra.mxu0 0.0
        %1369 = vmatprep.subr.mxu0 0.0
        %1370 = vmatpush1.msra.mxu0 0.0
        %1371 = vmatprep.subr.mxu0 0.0
        %1372 = vmatpush1.msra.mxu0 0.0
        %1373 = vmatprep.subr.mxu0 0.0
        %1374 = vmatpush1.msra.mxu0 0.0
        %1375 = vmatprep.subr.mxu0 0.0
        %1376 = vmatpush1.msra.mxu0 0.0
        %1377 = vmatprep.subr.mxu0 0.0
        %1378 = vmatpush1.msra.mxu0 0.0
        %1379 = vmatprep.subr.mxu0 0.0
        %1380 = vmatpush1.msra.mxu0 0.0
        %1381 = vmatprep.subr.mxu0 0.0
        %1382 = vmatpush1.msra.mxu0 0.0
        %1383 = vmatprep.subr.mxu0 0.0
        %1384 = vmatpush1.msra.mxu0 0.0
        %1385 = vmatprep.mubr.f32.mxu0 0.0
        %1386 = vmatmul.mubr.f32.gmra.mrb[0].mxu0 %v1319
        %v1387 = vpop.f32.mrb[0].mxu0
        %v1388 = vadd.f32 0.0, %v1387
        %v1389 = vpop.f32.mrb[0].mxu0
        %1390 = vdwg.mxu0
        %1391 = vrot.lane.b32.xlu0 %v812, 120
        %v1392 = vpop.permute.xlu0 %1391
        %v1395 = vsel %vm1194, %v1237, 0
        %1397 = vmatprep.subr.mxu0 0.0
        %1398 = vmatpush1.msra.mxu0 %v1392
        %1399 = vmatprep.subr.mxu0 0.0
        %1400 = vmatpush1.msra.mxu0 0.0
        %1401 = vmatprep.subr.mxu0 0.0
        %1402 = vmatpush1.msra.mxu0 0.0
        %1403 = vmatprep.subr.mxu0 0.0
        %1404 = vmatpush1.msra.mxu0 0.0
        %1405 = vmatprep.subr.mxu0 0.0
        %1406 = vmatpush1.msra.mxu0 0.0
        %1407 = vmatprep.subr.mxu0 0.0
        %1408 = vmatpush1.msra.mxu0 0.0
        %1409 = vmatprep.subr.mxu0 0.0
        %1410 = vmatpush1.msra.mxu0 0.0
        %1411 = vmatprep.subr.mxu0 0.0
        %1412 = vmatpush1.msra.mxu0 0.0
        %1413 = vmatprep.subr.mxu0 0.0
        %1414 = vmatpush1.msra.mxu0 0.0
        %1415 = vmatprep.subr.mxu0 0.0
        %1416 = vmatpush1.msra.mxu0 0.0
        %1417 = vmatprep.subr.mxu0 0.0
        %1418 = vmatpush1.msra.mxu0 0.0
        %1419 = vmatprep.subr.mxu0 0.0
        %1420 = vmatpush1.msra.mxu0 0.0
        %1421 = vmatprep.subr.mxu0 0.0
        %1422 = vmatpush1.msra.mxu0 0.0
        %1423 = vmatprep.subr.mxu0 0.0
        %1424 = vmatpush1.msra.mxu0 0.0
        %1425 = vmatprep.subr.mxu0 0.0
        %1426 = vmatpush1.msra.mxu0 0.0
        %1427 = vmatprep.subr.mxu0 0.0
        %1428 = vmatpush1.msra.mxu0 0.0
        %1429 = vmatprep.subr.mxu0 0.0
        %1430 = vmatpush1.msra.mxu0 0.0
        %1431 = vmatprep.subr.mxu0 0.0
        %1432 = vmatpush1.msra.mxu0 0.0
        %1433 = vmatprep.subr.mxu0 0.0
        %1434 = vmatpush1.msra.mxu0 0.0
        %1435 = vmatprep.subr.mxu0 0.0
        %1436 = vmatpush1.msra.mxu0 0.0
        %1437 = vmatprep.subr.mxu0 0.0
        %1438 = vmatpush1.msra.mxu0 0.0
        %1439 = vmatprep.subr.mxu0 0.0
        %1440 = vmatpush1.msra.mxu0 0.0
        %1441 = vmatprep.subr.mxu0 0.0
        %1442 = vmatpush1.msra.mxu0 0.0
        %1443 = vmatprep.subr.mxu0 0.0
        %1444 = vmatpush1.msra.mxu0 0.0
        %1445 = vmatprep.subr.mxu0 0.0
        %1446 = vmatpush1.msra.mxu0 0.0
        %1447 = vmatprep.subr.mxu0 0.0
        %1448 = vmatpush1.msra.mxu0 0.0
        %1449 = vmatprep.subr.mxu0 0.0
        %1450 = vmatpush1.msra.mxu0 0.0
        %1451 = vmatprep.subr.mxu0 0.0
        %1452 = vmatpush1.msra.mxu0 0.0
        %1453 = vmatprep.subr.mxu0 0.0
        %1454 = vmatpush1.msra.mxu0 0.0
        %1455 = vmatprep.subr.mxu0 0.0
        %1456 = vmatpush1.msra.mxu0 0.0
        %1457 = vmatprep.subr.mxu0 0.0
        %1458 = vmatpush1.msra.mxu0 0.0
        %1459 = vmatprep.subr.mxu0 0.0
        %1460 = vmatpush1.msra.mxu0 0.0
        %1461 = vmatprep.mubr.f32.mxu0 0.0
        %1462 = vmatmul.mubr.f32.gmra.mrb[0].mxu0 %v1395
        %v1463 = vpop.f32.mrb[0].mxu0
        %v1464 = vadd.f32 0.0, %v1463
        %v1465 = vpop.f32.mrb[0].mxu0
        %1466 = vdwg.mxu0
        %1467 = vrot.lane.b32.xlu0 %v882, 120
        %v1468 = vpop.permute.xlu0 %1467
        %v1471 = vsel %vm1194, %v1238, 0
        %1473 = vmatprep.subr.mxu0 0.0
        %1474 = vmatpush1.msra.mxu0 %v1468
        %1475 = vmatprep.subr.mxu0 0.0
        %1476 = vmatpush1.msra.mxu0 0.0
        %1477 = vmatprep.subr.mxu0 0.0
        %1478 = vmatpush1.msra.mxu0 0.0
        %1479 = vmatprep.subr.mxu0 0.0
        %1480 = vmatpush1.msra.mxu0 0.0
        %1481 = vmatprep.subr.mxu0 0.0
        %1482 = vmatpush1.msra.mxu0 0.0
        %1483 = vmatprep.subr.mxu0 0.0
        %1484 = vmatpush1.msra.mxu0 0.0
        %1485 = vmatprep.subr.mxu0 0.0
        %1486 = vmatpush1.msra.mxu0 0.0
        %1487 = vmatprep.subr.mxu0 0.0
        %1488 = vmatpush1.msra.mxu0 0.0
        %1489 = vmatprep.subr.mxu0 0.0
        %1490 = vmatpush1.msra.mxu0 0.0
        %1491 = vmatprep.subr.mxu0 0.0
        %1492 = vmatpush1.msra.mxu0 0.0
        %1493 = vmatprep.subr.mxu0 0.0
        %1494 = vmatpush1.msra.mxu0 0.0
        %1495 = vmatprep.subr.mxu0 0.0
        %1496 = vmatpush1.msra.mxu0 0.0
        %1497 = vmatprep.subr.mxu0 0.0
        %1498 = vmatpush1.msra.mxu0 0.0
        %1499 = vmatprep.subr.mxu0 0.0
        %1500 = vmatpush1.msra.mxu0 0.0
        %1501 = vmatprep.subr.mxu0 0.0
        %1502 = vmatpush1.msra.mxu0 0.0
        %1503 = vmatprep.subr.mxu0 0.0
        %1504 = vmatpush1.msra.mxu0 0.0
        %1505 = vmatprep.subr.mxu0 0.0
        %1506 = vmatpush1.msra.mxu0 0.0
        %1507 = vmatprep.subr.mxu0 0.0
        %1508 = vmatpush1.msra.mxu0 0.0
        %1509 = vmatprep.subr.mxu0 0.0
        %1510 = vmatpush1.msra.mxu0 0.0
        %1511 = vmatprep.subr.mxu0 0.0
        %1512 = vmatpush1.msra.mxu0 0.0
        %1513 = vmatprep.subr.mxu0 0.0
        %1514 = vmatpush1.msra.mxu0 0.0
        %1515 = vmatprep.subr.mxu0 0.0
        %1516 = vmatpush1.msra.mxu0 0.0
        %1517 = vmatprep.subr.mxu0 0.0
        %1518 = vmatpush1.msra.mxu0 0.0
        %1519 = vmatprep.subr.mxu0 0.0
        %1520 = vmatpush1.msra.mxu0 0.0
        %1521 = vmatprep.subr.mxu0 0.0
        %1522 = vmatpush1.msra.mxu0 0.0
        %1523 = vmatprep.subr.mxu0 0.0
        %1524 = vmatpush1.msra.mxu0 0.0
        %1525 = vmatprep.subr.mxu0 0.0
        %1526 = vmatpush1.msra.mxu0 0.0
        %1527 = vmatprep.subr.mxu0 0.0
        %1528 = vmatpush1.msra.mxu0 0.0
        %1529 = vmatprep.subr.mxu0 0.0
        %1530 = vmatpush1.msra.mxu0 0.0
        %1531 = vmatprep.subr.mxu0 0.0
        %1532 = vmatpush1.msra.mxu0 0.0
        %1533 = vmatprep.subr.mxu0 0.0
        %1534 = vmatpush1.msra.mxu0 0.0
        %1535 = vmatprep.subr.mxu0 0.0
        %1536 = vmatpush1.msra.mxu0 0.0
        %1537 = vmatprep.mubr.f32.mxu0 0.0
        %1538 = vmatmul.mubr.f32.gmra.mrb[0].mxu0 %v1471
        %v1539 = vpop.f32.mrb[0].mxu0
        %v1540 = vadd.f32 0.0, %v1539
        %v1541 = vpop.f32.mrb[0].mxu0
        %1542 = vdwg.mxu0
        %v1543 = vld [vmem:[#allocation8] sm:$0xf]
        %v1544 = vld [vmem:[#allocation8 + $0x4] sm:$0xf]
        %v1545 = vld [vmem:[#allocation8 + $0x8] sm:$0xf]
        %v1546 = vld [vmem:[#allocation8 + $0xc] sm:$0xf]
        %v1548 = vsel %vm888, %v1312, 0
        %vm1550 = vcmask 1043456
        %v1552 = vsel %vm1550, %v1543, 0
        %1554 = vmatprep.subr.mxu0 0.0
        %1555 = vmatpush1.msra.mxu0 %v1552
        %1556 = vmatprep.subr.mxu0 0.0
        %1557 = vmatpush1.msra.mxu0 0.0
        %1558 = vmatprep.subr.mxu0 0.0
        %1559 = vmatpush1.msra.mxu0 0.0
        %1560 = vmatprep.subr.mxu0 0.0
        %1561 = vmatpush1.msra.mxu0 0.0
        %1562 = vmatprep.subr.mxu0 0.0
        %1563 = vmatpush1.msra.mxu0 0.0
        %1564 = vmatprep.subr.mxu0 0.0
        %1565 = vmatpush1.msra.mxu0 0.0
        %1566 = vmatprep.subr.mxu0 0.0
        %1567 = vmatpush1.msra.mxu0 0.0
        %1568 = vmatprep.subr.mxu0 0.0
        %1569 = vmatpush1.msra.mxu0 0.0
        %1570 = vmatprep.subr.mxu0 0.0
        %1571 = vmatpush1.msra.mxu0 0.0
        %1572 = vmatprep.subr.mxu0 0.0
        %1573 = vmatpush1.msra.mxu0 0.0
        %1574 = vmatprep.subr.mxu0 0.0
        %1575 = vmatpush1.msra.mxu0 0.0
        %1576 = vmatprep.subr.mxu0 0.0
        %1577 = vmatpush1.msra.mxu0 0.0
        %1578 = vmatprep.subr.mxu0 0.0
        %1579 = vmatpush1.msra.mxu0 0.0
        %1580 = vmatprep.subr.mxu0 0.0
        %1581 = vmatpush1.msra.mxu0 0.0
        %1582 = vmatprep.subr.mxu0 0.0
        %1583 = vmatpush1.msra.mxu0 0.0
        %1584 = vmatprep.subr.mxu0 0.0
        %1585 = vmatpush1.msra.mxu0 0.0
        %1586 = vmatprep.subr.mxu0 0.0
        %1587 = vmatpush1.msra.mxu0 0.0
        %1588 = vmatprep.subr.mxu0 0.0
        %1589 = vmatpush1.msra.mxu0 0.0
        %1590 = vmatprep.subr.mxu0 0.0
        %1591 = vmatpush1.msra.mxu0 0.0
        %1592 = vmatprep.subr.mxu0 0.0
        %1593 = vmatpush1.msra.mxu0 0.0
        %1594 = vmatprep.subr.mxu0 0.0
        %1595 = vmatpush1.msra.mxu0 0.0
        %1596 = vmatprep.subr.mxu0 0.0
        %1597 = vmatpush1.msra.mxu0 0.0
        %1598 = vmatprep.subr.mxu0 0.0
        %1599 = vmatpush1.msra.mxu0 0.0
        %1600 = vmatprep.subr.mxu0 0.0
        %1601 = vmatpush1.msra.mxu0 0.0
        %1602 = vmatprep.subr.mxu0 0.0
        %1603 = vmatpush1.msra.mxu0 0.0
        %1604 = vmatprep.subr.mxu0 0.0
        %1605 = vmatpush1.msra.mxu0 0.0
        %1606 = vmatprep.subr.mxu0 0.0
        %1607 = vmatpush1.msra.mxu0 0.0
        %1608 = vmatprep.subr.mxu0 0.0
        %1609 = vmatpush1.msra.mxu0 0.0
        %1610 = vmatprep.subr.mxu0 0.0
        %1611 = vmatpush1.msra.mxu0 0.0
        %1612 = vmatprep.subr.mxu0 0.0
        %1613 = vmatpush1.msra.mxu0 0.0
        %1614 = vmatprep.subr.mxu0 0.0
        %1615 = vmatpush1.msra.mxu0 0.0
        %1616 = vmatprep.subr.mxu0 0.0
        %1617 = vmatpush1.msra.mxu0 0.0
        %1618 = vmatprep.mubr.f32.mxu0 0.0
        %1619 = vmatmul.mubr.f32.gmra.mrb[0].mxu0 %v1548
        %v1620 = vpop.f32.mrb[0].mxu0
        %v1621 = vadd.f32 0.0, %v1620
        %v1622 = vpop.f32.mrb[0].mxu0
        %1623 = vdwg.mxu0
        %v1625 = vsel %vm888, %v1388, 0
        %v1628 = vsel %vm1550, %v1544, 0
        %1630 = vmatprep.subr.mxu0 0.0
        %1631 = vmatpush1.msra.mxu0 %v1628
        %1632 = vmatprep.subr.mxu0 0.0
        %1633 = vmatpush1.msra.mxu0 0.0
        %1634 = vmatprep.subr.mxu0 0.0
        %1635 = vmatpush1.msra.mxu0 0.0
        %1636 = vmatprep.subr.mxu0 0.0
        %1637 = vmatpush1.msra.mxu0 0.0
        %1638 = vmatprep.subr.mxu0 0.0
        %1639 = vmatpush1.msra.mxu0 0.0
        %1640 = vmatprep.subr.mxu0 0.0
        %1641 = vmatpush1.msra.mxu0 0.0
        %1642 = vmatprep.subr.mxu0 0.0
        %1643 = vmatpush1.msra.mxu0 0.0
        %1644 = vmatprep.subr.mxu0 0.0
        %1645 = vmatpush1.msra.mxu0 0.0
        %1646 = vmatprep.subr.mxu0 0.0
        %1647 = vmatpush1.msra.mxu0 0.0
        %1648 = vmatprep.subr.mxu0 0.0
        %1649 = vmatpush1.msra.mxu0 0.0
        %1650 = vmatprep.subr.mxu0 0.0
        %1651 = vmatpush1.msra.mxu0 0.0
        %1652 = vmatprep.subr.mxu0 0.0
        %1653 = vmatpush1.msra.mxu0 0.0
        %1654 = vmatprep.subr.mxu0 0.0
        %1655 = vmatpush1.msra.mxu0 0.0
        %1656 = vmatprep.subr.mxu0 0.0
        %1657 = vmatpush1.msra.mxu0 0.0
        %1658 = vmatprep.subr.mxu0 0.0
        %1659 = vmatpush1.msra.mxu0 0.0
        %1660 = vmatprep.subr.mxu0 0.0
        %1661 = vmatpush1.msra.mxu0 0.0
        %1662 = vmatprep.subr.mxu0 0.0
        %1663 = vmatpush1.msra.mxu0 0.0
        %1664 = vmatprep.subr.mxu0 0.0
        %1665 = vmatpush1.msra.mxu0 0.0
        %1666 = vmatprep.subr.mxu0 0.0
        %1667 = vmatpush1.msra.mxu0 0.0
        %1668 = vmatprep.subr.mxu0 0.0
        %1669 = vmatpush1.msra.mxu0 0.0
        %1670 = vmatprep.subr.mxu0 0.0
        %1671 = vmatpush1.msra.mxu0 0.0
        %1672 = vmatprep.subr.mxu0 0.0
        %1673 = vmatpush1.msra.mxu0 0.0
        %1674 = vmatprep.subr.mxu0 0.0
        %1675 = vmatpush1.msra.mxu0 0.0
        %1676 = vmatprep.subr.mxu0 0.0
        %1677 = vmatpush1.msra.mxu0 0.0
        %1678 = vmatprep.subr.mxu0 0.0
        %1679 = vmatpush1.msra.mxu0 0.0
        %1680 = vmatprep.subr.mxu0 0.0
        %1681 = vmatpush1.msra.mxu0 0.0
        %1682 = vmatprep.subr.mxu0 0.0
        %1683 = vmatpush1.msra.mxu0 0.0
        %1684 = vmatprep.subr.mxu0 0.0
        %1685 = vmatpush1.msra.mxu0 0.0
        %1686 = vmatprep.subr.mxu0 0.0
        %1687 = vmatpush1.msra.mxu0 0.0
        %1688 = vmatprep.subr.mxu0 0.0
        %1689 = vmatpush1.msra.mxu0 0.0
        %1690 = vmatprep.subr.mxu0 0.0
        %1691 = vmatpush1.msra.mxu0 0.0
        %1692 = vmatprep.subr.mxu0 0.0
        %1693 = vmatpush1.msra.mxu0 0.0
        %1694 = vmatprep.mubr.f32.mxu0 0.0
        %1695 = vmatmul.mubr.f32.gmra.mrb[0].mxu0 %v1625
        %v1696 = vpop.f32.mrb[0].mxu0
        %v1697 = vadd.f32 0.0, %v1696
        %v1698 = vpop.f32.mrb[0].mxu0
        %1699 = vdwg.mxu0
        %v1701 = vsel %vm888, %v1464, 0
        %v1704 = vsel %vm1550, %v1545, 0
        %1706 = vmatprep.subr.mxu0 0.0
        %1707 = vmatpush1.msra.mxu0 %v1704
        %1708 = vmatprep.subr.mxu0 0.0
        %1709 = vmatpush1.msra.mxu0 0.0
        %1710 = vmatprep.subr.mxu0 0.0
        %1711 = vmatpush1.msra.mxu0 0.0
        %1712 = vmatprep.subr.mxu0 0.0
        %1713 = vmatpush1.msra.mxu0 0.0
        %1714 = vmatprep.subr.mxu0 0.0
        %1715 = vmatpush1.msra.mxu0 0.0
        %1716 = vmatprep.subr.mxu0 0.0
        %1717 = vmatpush1.msra.mxu0 0.0
        %1718 = vmatprep.subr.mxu0 0.0
        %1719 = vmatpush1.msra.mxu0 0.0
        %1720 = vmatprep.subr.mxu0 0.0
        %1721 = vmatpush1.msra.mxu0 0.0
        %1722 = vmatprep.subr.mxu0 0.0
        %1723 = vmatpush1.msra.mxu0 0.0
        %1724 = vmatprep.subr.mxu0 0.0
        %1725 = vmatpush1.msra.mxu0 0.0
        %1726 = vmatprep.subr.mxu0 0.0
        %1727 = vmatpush1.msra.mxu0 0.0
        %1728 = vmatprep.subr.mxu0 0.0
        %1729 = vmatpush1.msra.mxu0 0.0
        %1730 = vmatprep.subr.mxu0 0.0
        %1731 = vmatpush1.msra.mxu0 0.0
        %1732 = vmatprep.subr.mxu0 0.0
        %1733 = vmatpush1.msra.mxu0 0.0
        %1734 = vmatprep.subr.mxu0 0.0
        %1735 = vmatpush1.msra.mxu0 0.0
        %1736 = vmatprep.subr.mxu0 0.0
        %1737 = vmatpush1.msra.mxu0 0.0
        %1738 = vmatprep.subr.mxu0 0.0
        %1739 = vmatpush1.msra.mxu0 0.0
        %1740 = vmatprep.subr.mxu0 0.0
        %1741 = vmatpush1.msra.mxu0 0.0
        %1742 = vmatprep.subr.mxu0 0.0
        %1743 = vmatpush1.msra.mxu0 0.0
        %1744 = vmatprep.subr.mxu0 0.0
        %1745 = vmatpush1.msra.mxu0 0.0
        %1746 = vmatprep.subr.mxu0 0.0
        %1747 = vmatpush1.msra.mxu0 0.0
        %1748 = vmatprep.subr.mxu0 0.0
        %1749 = vmatpush1.msra.mxu0 0.0
        %1750 = vmatprep.subr.mxu0 0.0
        %1751 = vmatpush1.msra.mxu0 0.0
        %1752 = vmatprep.subr.mxu0 0.0
        %1753 = vmatpush1.msra.mxu0 0.0
        %1754 = vmatprep.subr.mxu0 0.0
        %1755 = vmatpush1.msra.mxu0 0.0
        %1756 = vmatprep.subr.mxu0 0.0
        %1757 = vmatpush1.msra.mxu0 0.0
        %1758 = vmatprep.subr.mxu0 0.0
        %1759 = vmatpush1.msra.mxu0 0.0
        %1760 = vmatprep.subr.mxu0 0.0
        %1761 = vmatpush1.msra.mxu0 0.0
        %1762 = vmatprep.subr.mxu0 0.0
        %1763 = vmatpush1.msra.mxu0 0.0
        %1764 = vmatprep.subr.mxu0 0.0
        %1765 = vmatpush1.msra.mxu0 0.0
        %1766 = vmatprep.subr.mxu0 0.0
        %1767 = vmatpush1.msra.mxu0 0.0
        %1768 = vmatprep.subr.mxu0 0.0
        %1769 = vmatpush1.msra.mxu0 0.0
        %1770 = vmatprep.mubr.f32.mxu0 0.0
        %1771 = vmatmul.mubr.f32.gmra.mrb[0].mxu0 %v1701
        %v1772 = vpop.f32.mrb[0].mxu0
        %v1773 = vadd.f32 0.0, %v1772
        %v1774 = vpop.f32.mrb[0].mxu0
        %1775 = vdwg.mxu0
        %v1777 = vsel %vm888, %v1540, 0
        %v1780 = vsel %vm1550, %v1546, 0
        %1782 = vmatprep.subr.mxu0 0.0
        %1783 = vmatpush1.msra.mxu0 %v1780
        %1784 = vmatprep.subr.mxu0 0.0
        %1785 = vmatpush1.msra.mxu0 0.0
        %1786 = vmatprep.subr.mxu0 0.0
        %1787 = vmatpush1.msra.mxu0 0.0
        %1788 = vmatprep.subr.mxu0 0.0
        %1789 = vmatpush1.msra.mxu0 0.0
        %1790 = vmatprep.subr.mxu0 0.0
        %1791 = vmatpush1.msra.mxu0 0.0
        %1792 = vmatprep.subr.mxu0 0.0
        %1793 = vmatpush1.msra.mxu0 0.0
        %1794 = vmatprep.subr.mxu0 0.0
        %1795 = vmatpush1.msra.mxu0 0.0
        %1796 = vmatprep.subr.mxu0 0.0
        %1797 = vmatpush1.msra.mxu0 0.0
        %1798 = vmatprep.subr.mxu0 0.0
        %1799 = vmatpush1.msra.mxu0 0.0
        %1800 = vmatprep.subr.mxu0 0.0
        %1801 = vmatpush1.msra.mxu0 0.0
        %1802 = vmatprep.subr.mxu0 0.0
        %1803 = vmatpush1.msra.mxu0 0.0
        %1804 = vmatprep.subr.mxu0 0.0
        %1805 = vmatpush1.msra.mxu0 0.0
        %1806 = vmatprep.subr.mxu0 0.0
        %1807 = vmatpush1.msra.mxu0 0.0
        %1808 = vmatprep.subr.mxu0 0.0
        %1809 = vmatpush1.msra.mxu0 0.0
        %1810 = vmatprep.subr.mxu0 0.0
        %1811 = vmatpush1.msra.mxu0 0.0
        %1812 = vmatprep.subr.mxu0 0.0
        %1813 = vmatpush1.msra.mxu0 0.0
        %1814 = vmatprep.subr.mxu0 0.0
        %1815 = vmatpush1.msra.mxu0 0.0
        %1816 = vmatprep.subr.mxu0 0.0
        %1817 = vmatpush1.msra.mxu0 0.0
        %1818 = vmatprep.subr.mxu0 0.0
        %1819 = vmatpush1.msra.mxu0 0.0
        %1820 = vmatprep.subr.mxu0 0.0
        %1821 = vmatpush1.msra.mxu0 0.0
        %1822 = vmatprep.subr.mxu0 0.0
        %1823 = vmatpush1.msra.mxu0 0.0
        %1824 = vmatprep.subr.mxu0 0.0
        %1825 = vmatpush1.msra.mxu0 0.0
        %1826 = vmatprep.subr.mxu0 0.0
        %1827 = vmatpush1.msra.mxu0 0.0
        %1828 = vmatprep.subr.mxu0 0.0
        %1829 = vmatpush1.msra.mxu0 0.0
        %1830 = vmatprep.subr.mxu0 0.0
        %1831 = vmatpush1.msra.mxu0 0.0
        %1832 = vmatprep.subr.mxu0 0.0
        %1833 = vmatpush1.msra.mxu0 0.0
        %1834 = vmatprep.subr.mxu0 0.0
        %1835 = vmatpush1.msra.mxu0 0.0
        %1836 = vmatprep.subr.mxu0 0.0
        %1837 = vmatpush1.msra.mxu0 0.0
        %1838 = vmatprep.subr.mxu0 0.0
        %1839 = vmatpush1.msra.mxu0 0.0
        %1840 = vmatprep.subr.mxu0 0.0
        %1841 = vmatpush1.msra.mxu0 0.0
        %1842 = vmatprep.subr.mxu0 0.0
        %1843 = vmatpush1.msra.mxu0 0.0
        %1844 = vmatprep.subr.mxu0 0.0
        %1845 = vmatpush1.msra.mxu0 0.0
        %1846 = vmatprep.mubr.f32.mxu0 0.0
        %1847 = vmatmul.mubr.f32.gmra.mrb[0].mxu0 %v1777
        %v1848 = vpop.f32.mrb[0].mxu0
        %v1849 = vadd.f32 0.0, %v1848
        %v1850 = vpop.f32.mrb[0].mxu0
        %1851 = vdwg.mxu0
        %v1852 = vsel %vm601, %v1621, 0.0
        %v1853 = vsel %vm601, %v1697, 0.0
        %v1854 = vadd.f32 %v1852, %v1853
        %v1855 = vsel %vm601, %v1773, 0.0
        %v1856 = vadd.f32 %v1854, %v1855
        %v1857 = vsel %vm601, %v1849, 0.0
        %v1858 = vadd.f32 %v1856, %v1857
        %v1859 = vld [vmem:[#allocation10] sm:$0x1]
        %v1861 = vlaneseq
        %v1862 = vshrl.u32 %v1861, 7
        %v1863 = vsub.s32 0, %v1862
        %v1864 = vrot.slane %v1859, %v1863
        %v1866 = vadd.f32 %v1858, %v1864
        %v1867 = vadd.f32 %v564, %v1866
        %v1868 = vsel %vm601, %v1867, 0.0
        %1869 = vadd.xlane.f32.xlu0 %v1868
        %v1870 = vpop.xlane.xlu0 %1869
        %v1871 = vrcp.pop 16.0
        %v1872 = vmul.f32 %v1870, %v1871
        %v1873 = vsub.f32 %v1867, %v1872
        %v1874 = vmul.f32 %v1873, %v1873
        %v1875 = vsel %vm601, %v1874, 0.0
        %1876 = vadd.xlane.f32.xlu0 %v1875
        %v1877 = vpop.xlane.xlu0 %1876
        %v1878 = vmul.f32 %v1877, %v1871
        %v1879 = vadd.f32 %v1878, 1e-05
        %v1880 = vrsqrt.pop %v1879
        %v1881 = vmul.f32 %v1873, %v1880
        %v1882 = vld [vmem:[#allocation11] sm:$0x1]
        %v1884 = vlaneseq
        %v1885 = vshrl.u32 %v1884, 7
        %v1886 = vsub.s32 0, %v1885
        %v1887 = vrot.slane %v1882, %v1886
        %v1889 = vmul.f32 %v1881, %v1887
        %v1890 = vld [vmem:[#allocation13] sm:$0x1]
        %v1892 = vlaneseq
        %v1893 = vshrl.u32 %v1892, 7
        %v1894 = vsub.s32 0, %v1893
        %v1895 = vrot.slane %v1890, %v1894
        %v1897 = vadd.f32 %v1889, %v1895
        %v1898 = vld [vmem:[#allocation14] sm:$0xff]
        %v1899 = vld [vmem:[#allocation14 + $0x8] sm:$0xff]
        %v1900 = vld [vmem:[#allocation16] sm:$0x1]
        %v1902 = vlaneseq
        %v1903 = vshrl.u32 %v1902, 7
        %v1904 = vsub.s32 0, %v1903
        %v1905 = vrot.slane %v1900, %v1904
        %v1908 = vsel %vm601, %v1897, 0
        %1910 = vmatprep.subr.mxu0 0.0
        %1911 = vmatpush1.msra.mxu0 %v1898
        %1912 = vmatprep.subr.mxu0 0.0
        %1913 = vmatpush1.msra.mxu0 %v1899
        %1914 = vmatprep.subr.mxu0 0.0
        %1915 = vmatpush1.msra.mxu0 0.0
        %1916 = vmatprep.subr.mxu0 0.0
        %1917 = vmatpush1.msra.mxu0 0.0
        %1918 = vmatprep.subr.mxu0 0.0
        %1919 = vmatpush1.msra.mxu0 0.0
        %1920 = vmatprep.subr.mxu0 0.0
        %1921 = vmatpush1.msra.mxu0 0.0
        %1922 = vmatprep.subr.mxu0 0.0
        %1923 = vmatpush1.msra.mxu0 0.0
        %1924 = vmatprep.subr.mxu0 0.0
        %1925 = vmatpush1.msra.mxu0 0.0
        %1926 = vmatprep.subr.mxu0 0.0
        %1927 = vmatpush1.msra.mxu0 0.0
        %1928 = vmatprep.subr.mxu0 0.0
        %1929 = vmatpush1.msra.mxu0 0.0
        %1930 = vmatprep.subr.mxu0 0.0
        %1931 = vmatpush1.msra.mxu0 0.0
        %1932 = vmatprep.subr.mxu0 0.0
        %1933 = vmatpush1.msra.mxu0 0.0
        %1934 = vmatprep.subr.mxu0 0.0
        %1935 = vmatpush1.msra.mxu0 0.0
        %1936 = vmatprep.subr.mxu0 0.0
        %1937 = vmatpush1.msra.mxu0 0.0
        %1938 = vmatprep.subr.mxu0 0.0
        %1939 = vmatpush1.msra.mxu0 0.0
        %1940 = vmatprep.subr.mxu0 0.0
        %1941 = vmatpush1.msra.mxu0 0.0
        %1942 = vmatprep.subr.mxu0 0.0
        %1943 = vmatpush1.msra.mxu0 0.0
        %1944 = vmatprep.subr.mxu0 0.0
        %1945 = vmatpush1.msra.mxu0 0.0
        %1946 = vmatprep.subr.mxu0 0.0
        %1947 = vmatpush1.msra.mxu0 0.0
        %1948 = vmatprep.subr.mxu0 0.0
        %1949 = vmatpush1.msra.mxu0 0.0
        %1950 = vmatprep.subr.mxu0 0.0
        %1951 = vmatpush1.msra.mxu0 0.0
        %1952 = vmatprep.subr.mxu0 0.0
        %1953 = vmatpush1.msra.mxu0 0.0
        %1954 = vmatprep.subr.mxu0 0.0
        %1955 = vmatpush1.msra.mxu0 0.0
        %1956 = vmatprep.subr.mxu0 0.0
        %1957 = vmatpush1.msra.mxu0 0.0
        %1958 = vmatprep.subr.mxu0 0.0
        %1959 = vmatpush1.msra.mxu0 0.0
        %1960 = vmatprep.subr.mxu0 0.0
        %1961 = vmatpush1.msra.mxu0 0.0
        %1962 = vmatprep.subr.mxu0 0.0
        %1963 = vmatpush1.msra.mxu0 0.0
        %1964 = vmatprep.subr.mxu0 0.0
        %1965 = vmatpush1.msra.mxu0 0.0
        %1966 = vmatprep.subr.mxu0 0.0
        %1967 = vmatpush1.msra.mxu0 0.0
        %1968 = vmatprep.subr.mxu0 0.0
        %1969 = vmatpush1.msra.mxu0 0.0
        %1970 = vmatprep.subr.mxu0 0.0
        %1971 = vmatpush1.msra.mxu0 0.0
        %1972 = vmatprep.subr.mxu0 0.0
        %1973 = vmatpush1.msra.mxu0 0.0
        %1974 = vmatprep.mubr.f32.mxu0 0.0
        %1975 = vmatmul.mubr.f32.gmra.mrb[0].mxu0 %v1908
        %v1976 = vpop.f32.mrb[0].mxu0
        %v1977 = vadd.f32 %v1905, %v1976
        %v1978 = vpop.f32.mrb[0].mxu0
        %1979 = vdwg.mxu0
        %v1980 = vmax.f32 %v1977, 0.0
        %v1981 = vld [vmem:[%s9] sm:$0xff]
        %v1982 = vld [vmem:[%s9 + $0x8] sm:$0xff]
        %v1983 = vld [vmem:[%s9 + $0x10] sm:$0xff]
        %v1984 = vld [vmem:[%s9 + $0x18] sm:$0xff]
        %v1985 = vld [vmem:[%s10] sm:$0x1]
        %v1987 = vlaneseq
        %v1988 = vshrl.u32 %v1987, 7
        %v1989 = vsub.s32 0, %v1988
        %v1990 = vrot.slane %v1985, %v1989
        %vm1992 = vcmask 261120
        %v1994 = vsel %vm1992, %v1980, 0
        %1996 = vmatprep.subr.mxu0 0.0
        %1997 = vmatpush1.msra.mxu0 %v1981
        %1998 = vmatprep.subr.mxu0 0.0
        %1999 = vmatpush1.msra.mxu0 %v1982
        %2000 = vmatprep.subr.mxu0 0.0
        %2001 = vmatpush1.msra.mxu0 %v1983
        %2002 = vmatprep.subr.mxu0 0.0
        %2003 = vmatpush1.msra.mxu0 %v1984
        %2004 = vmatprep.subr.mxu0 0.0
        %2005 = vmatpush1.msra.mxu0 0.0
        %2006 = vmatprep.subr.mxu0 0.0
        %2007 = vmatpush1.msra.mxu0 0.0
        %2008 = vmatprep.subr.mxu0 0.0
        %2009 = vmatpush1.msra.mxu0 0.0
        %2010 = vmatprep.subr.mxu0 0.0
        %2011 = vmatpush1.msra.mxu0 0.0
        %2012 = vmatprep.subr.mxu0 0.0
        %2013 = vmatpush1.msra.mxu0 0.0
        %2014 = vmatprep.subr.mxu0 0.0
        %2015 = vmatpush1.msra.mxu0 0.0
        %2016 = vmatprep.subr.mxu0 0.0
        %2017 = vmatpush1.msra.mxu0 0.0
        %2018 = vmatprep.subr.mxu0 0.0
        %2019 = vmatpush1.msra.mxu0 0.0
        %2020 = vmatprep.subr.mxu0 0.0
        %2021 = vmatpush1.msra.mxu0 0.0
        %2022 = vmatprep.subr.mxu0 0.0
        %2023 = vmatpush1.msra.mxu0 0.0
        %2024 = vmatprep.subr.mxu0 0.0
        %2025 = vmatpush1.msra.mxu0 0.0
        %2026 = vmatprep.subr.mxu0 0.0
        %2027 = vmatpush1.msra.mxu0 0.0
        %2028 = vmatprep.subr.mxu0 0.0
        %2029 = vmatpush1.msra.mxu0 0.0
        %2030 = vmatprep.subr.mxu0 0.0
        %2031 = vmatpush1.msra.mxu0 0.0
        %2032 = vmatprep.subr.mxu0 0.0
        %2033 = vmatpush1.msra.mxu0 0.0
        %2034 = vmatprep.subr.mxu0 0.0
        %2035 = vmatpush1.msra.mxu0 0.0
        %2036 = vmatprep.subr.mxu0 0.0
        %2037 = vmatpush1.msra.mxu0 0.0
        %2038 = vmatprep.subr.mxu0 0.0
        %2039 = vmatpush1.msra.mxu0 0.0
        %2040 = vmatprep.subr.mxu0 0.0
        %2041 = vmatpush1.msra.mxu0 0.0
        %2042 = vmatprep.subr.mxu0 0.0
        %2043 = vmatpush1.msra.mxu0 0.0
        %2044 = vmatprep.subr.mxu0 0.0
        %2045 = vmatpush1.msra.mxu0 0.0
        %2046 = vmatprep.subr.mxu0 0.0
        %2047 = vmatpush1.msra.mxu0 0.0
        %2048 = vmatprep.subr.mxu0 0.0
        %2049 = vmatpush1.msra.mxu0 0.0
        %2050 = vmatprep.subr.mxu0 0.0
        %2051 = vmatpush1.msra.mxu0 0.0
        %2052 = vmatprep.subr.mxu0 0.0
        %2053 = vmatpush1.msra.mxu0 0.0
        %2054 = vmatprep.subr.mxu0 0.0
        %2055 = vmatpush1.msra.mxu0 0.0
        %2056 = vmatprep.subr.mxu0 0.0
        %2057 = vmatpush1.msra.mxu0 0.0
        %2058 = vmatprep.subr.mxu0 0.0
        %2059 = vmatpush1.msra.mxu0 0.0
        %2060 = vmatprep.mubr.f32.mxu0 0.0
        %2061 = vmatmul.mubr.f32.gmra.mrb[0].mxu0 %v1994
        %v2062 = vpop.f32.mrb[0].mxu0
        %v2063 = vadd.f32 %v1990, %v2062
        %v2064 = vpop.f32.mrb[0].mxu0
        %2065 = vdwg.mxu0
        %v2066 = vadd.f32 %v1897, %v2063
        %v2067 = vsel %vm601, %v2066, 0.0
        %2068 = vadd.xlane.f32.xlu0 %v2067
        %v2069 = vpop.xlane.xlu0 %2068
        %v2070 = vmul.f32 %v2069, %v1871
        %v2071 = vsub.f32 %v2066, %v2070
        %v2072 = vmul.f32 %v2071, %v2071
        %v2073 = vsel %vm601, %v2072, 0.0
        %2074 = vadd.xlane.f32.xlu0 %v2073
        %v2075 = vpop.xlane.xlu0 %2074
        %v2076 = vmul.f32 %v2075, %v1871
        %v2077 = vadd.f32 %v2076, 1e-05
        %v2078 = vrsqrt.pop %v2077
        %v2079 = vmul.f32 %v2071, %v2078
        %v2080 = vld [vmem:[%s11] sm:$0x1]
        %v2082 = vlaneseq
        %v2083 = vshrl.u32 %v2082, 7
        %v2084 = vsub.s32 0, %v2083
        %v2085 = vrot.slane %v2080, %v2084
        %v2087 = vmul.f32 %v2079, %v2085
        %v2088 = vld [vmem:[%s12] sm:$0x1]
        %v2090 = vlaneseq
        %v2091 = vshrl.u32 %v2090, 7
        %v2092 = vsub.s32 0, %v2091
        %v2093 = vrot.slane %v2088, %v2092
        %v2095 = vadd.f32 %v2087, %v2093
        %2096 = vst.msk [vmem:[%s563] sm:$0xff] %vm601, %v2095
        %s2097 = sand.u32 %s320, 1
        %s2098 = scalar_lea.sflag [#allocation4], %s2097
        %s2099 = sand.u32 %s320, 1
        %s2100 = smul.addr %s2099, 8
        %s2101 = scalar_lea.vmem [#allocation17], %s2100
        // Predicated region
        $region109: #{encoder_layer.1} parent=71 // pred_check
          %p2102 = pneg %p330
        $region110: #{encoder_layer.1} parent=71 // pred_check_branch
          %2104 = sbr.rel (%p2102) target = $region112
        $region111: #{encoder_layer.1} parent=71 // pred_region
          %s2106 = ssub.s32 128, 128
          %2107 = vsyncadd %s2098, %s2106
          %s2108 = smul.addr %s34, 128
          %s2109 = scalar_lea.hbm %s13, %s2108
          %s2111 = sshll.u32 %s2101, 4
          %s2112 = int_to_ptr.vmem [resolvable:$true] %s2111
          %2114 = dma.vmem_to_hbm [thread:$0]  %s2112, 128, %s2109, %s2098
        $region112: #{encoder_layer.1} parent=71 // pred_fallthru
          _
      $region72: #{encoder_layer.1} parent=5 // pred_fallthru
        _
      %p2115 = scmp.le.s32.totalorder 2, %s29
      // Predicated region
      $region113: #{encoder_layer.1} parent=5 // pred_check
        %p2116 = pneg %p2115
      $region114: #{encoder_layer.1} parent=5 // pred_check_branch
        %2118 = sbr.rel (%p2116) target = $region116
      $region115: #{encoder_layer.1} parent=5 // pred_region
        %s2119 = ssub.s32 %s29, 2
        // Predicated region
        $region117: #{encoder_layer.1} parent=115 // pred_check
          %p2120 = pneg %p336
        $region118: #{encoder_layer.1} parent=115 // pred_check_branch
          %2122 = sbr.rel (%p2120) target = $region120
        $region119: #{encoder_layer.1} parent=115 // pred_region
          %s2123 = sand.u32 %s321, 1
          %s2124 = scalar_lea.sflag [#allocation4], %s2123
          %s2125 = sand.u32 %s321, 1
          %s2126 = smul.addr %s2125, 8
          %s2127 = scalar_lea.vmem [#allocation17], %s2126
          %2128 = dma.done %s2124, 128
        $region120: #{encoder_layer.1} parent=115 // pred_fallthru
          _
      $region116: #{encoder_layer.1} parent=5 // pred_fallthru
        _
    $region6: #{encoder_layer.1} parent=1 // loop_footer
      %s33 = sadd.s32 1, %s29
    $region7: #{encoder_layer.1} parent=1 // loop_footer_branch
      %28 = sbr.rel target = $region3
    $region8: #{encoder_layer.1} parent=1 // loop_exit
      _
    %2129 = vsyncpa [#allocation3], 1
    %s2130 = scalar_lea.sflag [#allocation3], 1
    %2131 = vsyncpa %s2130, 1
    %2132 = vsyncpa [#allocation6], 1
    %2133 = vsyncpa [#allocation9], 1
    %2134 = vsyncpa [#allocation12], 1
    %2135 = vsyncpa [#allocation15], 1
    %2136 = vsyncpa [#allocation4], 1
    %s2137 = scalar_lea.sflag [#allocation4], 1
    %2138 = vsyncpa %s2137, 1

</llo_original>
